<compile_context>
chip_gen: v5e
topology: v5e:2x2
jax: 0.10.0
libtpu: 0.0.40
codegen_flags: <defaults>
</compile_context>

<pallas_src>
import numpy as np
import jax
import jax.numpy as jnp
from jax.experimental import pallas as pl
from jax.experimental.pallas import tpu as pltpu


# ----------------------------------------------------------------------------
# Fused per-layer Pallas kernel (one grid step == one batch element).
# ----------------------------------------------------------------------------
def _coattn_layer_kernel(q_ref, v_ref,
                         qpad_r_ref, qpad_c_ref, vpad_r_ref, vpad_c_ref,
                         rqv_ref, rvq_ref, w_ref,
                         oq_ref, ov_ref, oqc_ref, ovc_ref):
    f32 = jnp.float32

    q_in = q_ref[0]            # (Lq, D)
    v_in = v_ref[0]            # (Lv, D)
    qpad_r = qpad_r_ref[0]     # (1, Lq)  1.0 where question row is padding
    qpad_c = qpad_c_ref[0]     # (Lq, 1)
    vpad_r = vpad_r_ref[0]     # (1, Lv)  1.0 where video row is padding
    vpad_c = vpad_c_ref[0]     # (Lv, 1)

    d = q_in.shape[-1]
    scale = float(d) ** -0.5

    wq, wk, wvq, wvv = w_ref[0], w_ref[1], w_ref[2], w_ref[3]
    wfqv, wfvq = w_ref[4], w_ref[5]

    def mm(a, b):
        return jnp.dot(a, b, preferred_element_type=f32)

    # The four input projections (bias-free Linear layers).
    question_q = mm(q_in, wq)      # (Lq, D)
    video_k    = mm(v_in, wk)      # (Lv, D)
    question_v = mm(q_in, wvq)     # (Lq, D)
    video_v    = mm(v_in, wvv)     # (Lv, D)

    def attend(scores, key_pad_row, query_pad_col, values, w_final):
        # scale -> mask keys with -inf -> softmax -> zero padded query rows
        s = jnp.where(key_pad_row > 0.5, -jnp.inf, scores * scale)
        m = jnp.max(s, axis=-1, keepdims=True)
        e = jnp.exp(s - m)
        p = e / jnp.sum(e, axis=-1, keepdims=True)
        p = jnp.where(query_pad_col > 0.5, f32(0.0), p)
        return mm(mm(p, values), w_final)

    # Cross-attention scores (contract feature dims; no explicit transpose).
    scores_qv = jax.lax.dot_general(question_q, video_k,
                                    (((1,), (1,)), ((), ())),
                                    preferred_element_type=f32)   # (Lq, Lv)
    scores_vq = jax.lax.dot_general(video_k, question_q,
                                    (((1,), (1,)), ((), ())),
                                    preferred_element_type=f32)   # (Lv, Lq)

    out_qv = attend(scores_qv, vpad_r, qpad_c, video_v, wfqv)     # (Lq, D)
    out_vq = attend(scores_vq, qpad_r, vpad_c, question_v, wfvq)  # (Lv, D)

    # Counter branches: pre-softmax scores are U(0,1) noise.
    out_qv_c = attend(rqv_ref[0], vpad_r, qpad_c, video_v, wfqv)
    out_vq_c = attend(rvq_ref[0], qpad_r, vpad_c, question_v, wfvq)

    def layer_norm(x):            # elementwise_affine=False, eps=1e-5, biased var
        mu = jnp.mean(x, axis=-1, keepdims=True)
        xc = x - mu
        var = jnp.mean(xc * xc, axis=-1, keepdims=True)
        return xc * jax.lax.rsqrt(var + f32(1e-5))

    oq_ref[0]  = layer_norm(out_qv + q_in).astype(oq_ref.dtype)
    ov_ref[0]  = layer_norm(out_vq + v_in).astype(ov_ref.dtype)
    oqc_ref[0] = layer_norm(out_qv - out_qv_c + q_in).astype(oqc_ref.dtype)
    ovc_ref[0] = layer_norm(out_vq - out_vq_c + v_in).astype(ovc_ref.dtype)


def coattention_layer(weights, question, video, q_pad, v_pad, rand_qv, rand_vq):
    """One CoAttentionLayer_counter2 forward; weights is (6, D, D) stacked as
    [Wq, Wk, Wvq, Wvv, Wfqv, Wfvq], each stored (in, out)."""
    B, Lq, D = question.shape
    Lv = video.shape[1]

    qpad_r = q_pad.astype(jnp.float32).reshape(B, 1, Lq)
    qpad_c = q_pad.astype(jnp.float32).reshape(B, Lq, 1)
    vpad_r = v_pad.astype(jnp.float32).reshape(B, 1, Lv)
    vpad_c = v_pad.astype(jnp.float32).reshape(B, Lv, 1)

    out_shape = (jax.ShapeDtypeStruct((B, Lq, D), jnp.float32),
                 jax.ShapeDtypeStruct((B, Lv, D), jnp.float32),
                 jax.ShapeDtypeStruct((B, Lq, D), jnp.float32),
                 jax.ShapeDtypeStruct((B, Lv, D), jnp.float32))

    in_specs = [
        pl.BlockSpec((1, Lq, D),  lambda b: (b, 0, 0)),   # question
        pl.BlockSpec((1, Lv, D),  lambda b: (b, 0, 0)),   # video
        pl.BlockSpec((1, 1, Lq),  lambda b: (b, 0, 0)),   # q pad (row layout)
        pl.BlockSpec((1, Lq, 1),  lambda b: (b, 0, 0)),   # q pad (col layout)
        pl.BlockSpec((1, 1, Lv),  lambda b: (b, 0, 0)),   # v pad (row layout)
        pl.BlockSpec((1, Lv, 1),  lambda b: (b, 0, 0)),   # v pad (col layout)
        pl.BlockSpec((1, Lq, Lv), lambda b: (b, 0, 0)),   # counter noise qv
        pl.BlockSpec((1, Lv, Lq), lambda b: (b, 0, 0)),   # counter noise vq
        pl.BlockSpec((6, D, D),   lambda b: (0, 0, 0)),   # stacked weights (constant)
    ]
    out_specs = [
        pl.BlockSpec((1, Lq, D), lambda b: (b, 0, 0)),
        pl.BlockSpec((1, Lv, D), lambda b: (b, 0, 0)),
        pl.BlockSpec((1, Lq, D), lambda b: (b, 0, 0)),
        pl.BlockSpec((1, Lv, D), lambda b: (b, 0, 0)),
    ]

    return pl.pallas_call(
        _coattn_layer_kernel,
        out_shape=out_shape,
        grid_spec=pltpu.PrefetchScalarGridSpec(
            num_scalar_prefetch=0,
            grid=(B,),
            in_specs=in_specs,
            out_specs=out_specs),
        compiler_params=pltpu.CompilerParams(
            dimension_semantics=("parallel",)),
    )(question, video, qpad_r, qpad_c, vpad_r, vpad_c, rand_qv, rand_vq, weights)


# ----------------------------------------------------------------------------
# n-layer driver (matches CoAttention_nlayer_counter.forward)
# ----------------------------------------------------------------------------
def coattention_nlayer_counter_forward(layer_weights, layer_randoms,
                                       question, video):
    # Masks are computed ONCE from the original inputs (as in the module).
    q_pad = (jnp.sum(question, axis=-1) == 0)   # (B, Lq)
    v_pad = (jnp.sum(video, axis=-1) == 0)      # (B, Lv)
    q, v = question, video
    qc = vc = None
    for layer, (w, rnd) in enumerate(zip(layer_weights, layer_randoms)):
        rqv, rvq, rqv2, rvq2 = rnd
        if layer == 0:
            q, v, qc, vc = coattention_layer(w, q, v, q_pad, v_pad, rqv, rvq)
        else:
            q, v, _, _ = coattention_layer(w, q, v, q_pad, v_pad, rqv, rvq)
            _, _, qc, vc = coattention_layer(w, qc, vc, q_pad, v_pad, rqv2, rvq2)
    return q, v, qc, vc


# ----------------------------------------------------------------------------
# Pure-JAX reference (same math, same noise arrays) for correctness checking.
# ----------------------------------------------------------------------------
def _reference_layer(weights, question, video, q_pad, v_pad, rand_qv, rand_vq):
    wq, wk, wvq, wvv, wfqv, wfvq = [weights[i] for i in range(6)]
    D = question.shape[-1]
    scale = float(D) ** -0.5

    question_q = question @ wq
    video_k = video @ wk
    question_v = question @ wvq
    video_v = video @ wvv

    attn_mask = v_pad[:, None, :]     # keys padded (qv)
    smax_mask = q_pad[:, :, None]     # query rows padded (qv)
    attn_mask_ = q_pad[:, None, :]    # keys padded (vq)
    smax_mask_ = v_pad[:, :, None]    # query rows padded (vq)

    def attend(scores, amask, smask, values, wf):
        s = jnp.where(amask, -jnp.inf, scores * scale)
        p = jax.nn.softmax(s, axis=-1)
        p = jnp.where(smask, 0.0, p)
        return (p @ values) @ wf

    scores_qv = jnp.einsum('bqd,bkd->bqk', question_q, video_k)
    scores_vq = jnp.einsum('bqd,bkd->bqk', video_k, question_q)

    out_qv = attend(scores_qv, attn_mask, smax_mask, video_v, wfqv)
    out_vq = attend(scores_vq, attn_mask_, smax_mask_, question_v, wfvq)
    out_qv_c = attend(rand_qv, attn_mask, smax_mask, video_v, wfqv)
    out_vq_c = attend(rand_vq, attn_mask_, smax_mask_, question_v, wfvq)

    def ln(x):
        mu = jnp.mean(x, -1, keepdims=True)
        var = jnp.mean((x - mu) ** 2, -1, keepdims=True)
        return (x - mu) / jnp.sqrt(var + 1e-5)

    return (ln(out_qv + question), ln(out_vq + video),
            ln(out_qv - out_qv_c + question), ln(out_vq - out_vq_c + video))


def reference_nlayer_forward(layer_weights, layer_randoms, question, video):
    q_pad = (jnp.sum(question, axis=-1) == 0)
    v_pad = (jnp.sum(video, axis=-1) == 0)
    q, v = question, video
    qc = vc = None
    for layer, (w, rnd) in enumerate(zip(layer_weights, layer_randoms)):
        rqv, rvq, rqv2, rvq2 = rnd
        if layer == 0:
            q, v, qc, vc = _reference_layer(w, q, v, q_pad, v_pad, rqv, rvq)
        else:
            q, v, _, _ = _reference_layer(w, q, v, q_pad, v_pad, rqv, rvq)
            _, _, qc, vc = _reference_layer(w, qc, vc, q_pad, v_pad, rqv2, rvq2)
    return q, v, qc, vc


if __name__ == "__main__":
    B, Lq, Lv, D = 2, 8, 4, 32
    n_layers = 1   # module default

    key = jax.random.PRNGKey(0)
    kq, kv, kw, kr = jax.random.split(key, 4)

    question = jax.random.normal(kq, (B, Lq, D), jnp.float32)
    video = jax.random.normal(kv, (B, Lv, D), jnp.float32)
    # Zero-pad tails; the module infers padding from all-zero feature rows.
    q_len = jnp.array([Lq, 5], jnp.int32)
    v_len = jnp.array([Lv, 3], jnp.int32)
    question = question * (jnp.arange(Lq)[None, :, None]
                           < q_len[:, None, None]).astype(jnp.float32)
    video = video * (jnp.arange(Lv)[None, :, None]
                     < v_len[:, None, None]).astype(jnp.float32)

    layer_weights, layer_randoms = [], []
    for _ in range(n_layers):
        kw, k1 = jax.random.split(kw)
        layer_weights.append(
            jax.random.normal(k1, (6, D, D), jnp.float32) * 0.1)
        kr, r1, r2, r3, r4 = jax.random.split(kr, 5)
        layer_randoms.append((
            jax.random.uniform(r1, (B, Lq, Lv), jnp.float32),
            jax.random.uniform(r2, (B, Lv, Lq), jnp.float32),
            jax.random.uniform(r3, (B, Lq, Lv), jnp.float32),
            jax.random.uniform(r4, (B, Lv, Lq), jnp.float32),
        ))

    outs = coattention_nlayer_counter_forward(layer_weights, layer_randoms,
                                              question, video)
    jax.block_until_ready(outs)

    refs = reference_nlayer_forward(layer_weights, layer_randoms,
                                    question, video)
    for o, r in zip(outs, refs):
        np.testing.assert_allclose(np.asarray(o), np.asarray(r),
                                   rtol=1e-4, atol=1e-4)

    # TODO(synk): torch's in-place uniform_ RNG stream is not reproducible in
    # JAX; the U(0,1) counter noise is drawn with jax.random in the wrapper.
    print("KERNEL_OK")
</pallas_src>

<mosaic_0001>
module attributes {stable_mosaic.version = 11 : i64} {
  func.func @_coattn_layer_kernel(%arg0: i32, %arg1: memref<1x8x32xf32, #tpu.memory_space<vmem>>, %arg2: memref<1x4x32xf32, #tpu.memory_space<vmem>>, %arg3: memref<1x1x8xf32, #tpu.memory_space<vmem>>, %arg4: memref<1x8x1xf32, #tpu.memory_space<vmem>>, %arg5: memref<1x1x4xf32, #tpu.memory_space<vmem>>, %arg6: memref<1x4x1xf32, #tpu.memory_space<vmem>>, %arg7: memref<1x8x4xf32, #tpu.memory_space<vmem>>, %arg8: memref<1x4x8xf32, #tpu.memory_space<vmem>>, %arg9: memref<6x32x32xf32, #tpu.memory_space<vmem>>, %arg10: memref<1x8x32xf32, #tpu.memory_space<vmem>>, %arg11: memref<1x4x32xf32, #tpu.memory_space<vmem>>, %arg12: memref<1x8x32xf32, #tpu.memory_space<vmem>>, %arg13: memref<1x4x32xf32, #tpu.memory_space<vmem>>) attributes {dimension_semantics = [#tpu.dimension_semantics<parallel>], iteration_bounds = array<i64: 2>, scalar_prefetch = 0 : i64, scratch_operands = 0 : i64, tpu.core_type = #tpu.core_type<tc>, window_params = [{transform_indices = @transform_0, window_bounds = array<i64: 1, 8, 32>}, {transform_indices = @transform_1, window_bounds = array<i64: 1, 4, 32>}, {transform_indices = @transform_2, window_bounds = array<i64: 1, 1, 8>}, {transform_indices = @transform_3, window_bounds = array<i64: 1, 8, 1>}, {transform_indices = @transform_4, window_bounds = array<i64: 1, 1, 4>}, {transform_indices = @transform_5, window_bounds = array<i64: 1, 4, 1>}, {transform_indices = @transform_6, window_bounds = array<i64: 1, 8, 4>}, {transform_indices = @transform_7, window_bounds = array<i64: 1, 4, 8>}, {pipeline_mode = #tpu.pipeline_mode<synchronous>, transform_indices = @transform_8, window_bounds = array<i64: 6, 32, 32>}, {transform_indices = @transform_9, window_bounds = array<i64: 1, 8, 32>}, {transform_indices = @transform_10, window_bounds = array<i64: 1, 4, 32>}, {transform_indices = @transform_11, window_bounds = array<i64: 1, 8, 32>}, {transform_indices = @transform_12, window_bounds = array<i64: 1, 4, 32>}]} {
    %c0 = arith.constant 0 : index
    %c0_0 = arith.constant 0 : index
    %c0_1 = arith.constant 0 : index
    %0 = vector.load %arg1[%c0, %c0_0, %c0_1] : memref<1x8x32xf32, #tpu.memory_space<vmem>>, vector<1x8x32xf32>
    %1 = vector.shape_cast %0 : vector<1x8x32xf32> to vector<8x32xf32>
    %c0_2 = arith.constant 0 : index
    %c0_3 = arith.constant 0 : index
    %c0_4 = arith.constant 0 : index
    %2 = vector.load %arg2[%c0_2, %c0_3, %c0_4] : memref<1x4x32xf32, #tpu.memory_space<vmem>>, vector<1x4x32xf32>
    %3 = vector.shape_cast %2 : vector<1x4x32xf32> to vector<4x32xf32>
    %c0_5 = arith.constant 0 : index
    %c0_6 = arith.constant 0 : index
    %c0_7 = arith.constant 0 : index
    %4 = vector.load %arg3[%c0_5, %c0_6, %c0_7] : memref<1x1x8xf32, #tpu.memory_space<vmem>>, vector<1x1x8xf32>
    %5 = vector.shape_cast %4 : vector<1x1x8xf32> to vector<1x8xf32>
    %c0_8 = arith.constant 0 : index
    %c0_9 = arith.constant 0 : index
    %c0_10 = arith.constant 0 : index
    %6 = vector.load %arg4[%c0_8, %c0_9, %c0_10] : memref<1x8x1xf32, #tpu.memory_space<vmem>>, vector<1x8x1xf32>
    %7 = vector.shape_cast %6 : vector<1x8x1xf32> to vector<8x1xf32>
    %c0_11 = arith.constant 0 : index
    %c0_12 = arith.constant 0 : index
    %c0_13 = arith.constant 0 : index
    %8 = vector.load %arg5[%c0_11, %c0_12, %c0_13] : memref<1x1x4xf32, #tpu.memory_space<vmem>>, vector<1x1x4xf32>
    %9 = vector.shape_cast %8 : vector<1x1x4xf32> to vector<1x4xf32>
    %c0_14 = arith.constant 0 : index
    %c0_15 = arith.constant 0 : index
    %c0_16 = arith.constant 0 : index
    %10 = vector.load %arg6[%c0_14, %c0_15, %c0_16] : memref<1x4x1xf32, #tpu.memory_space<vmem>>, vector<1x4x1xf32>
    %11 = vector.shape_cast %10 : vector<1x4x1xf32> to vector<4x1xf32>
    %c0_17 = arith.constant 0 : index
    %c0_18 = arith.constant 0 : index
    %c0_19 = arith.constant 0 : index
    %12 = vector.load %arg9[%c0_17, %c0_18, %c0_19] : memref<6x32x32xf32, #tpu.memory_space<vmem>>, vector<1x32x32xf32>
    %13 = vector.shape_cast %12 : vector<1x32x32xf32> to vector<32x32xf32>
    %c1 = arith.constant 1 : index
    %c0_20 = arith.constant 0 : index
    %c0_21 = arith.constant 0 : index
    %14 = vector.load %arg9[%c1, %c0_20, %c0_21] : memref<6x32x32xf32, #tpu.memory_space<vmem>>, vector<1x32x32xf32>
    %15 = vector.shape_cast %14 : vector<1x32x32xf32> to vector<32x32xf32>
    %c2 = arith.constant 2 : index
    %c0_22 = arith.constant 0 : index
    %c0_23 = arith.constant 0 : index
    %16 = vector.load %arg9[%c2, %c0_22, %c0_23] : memref<6x32x32xf32, #tpu.memory_space<vmem>>, vector<1x32x32xf32>
    %17 = vector.shape_cast %16 : vector<1x32x32xf32> to vector<32x32xf32>
    %c3 = arith.constant 3 : index
    %c0_24 = arith.constant 0 : index
    %c0_25 = arith.constant 0 : index
    %18 = vector.load %arg9[%c3, %c0_24, %c0_25] : memref<6x32x32xf32, #tpu.memory_space<vmem>>, vector<1x32x32xf32>
    %19 = vector.shape_cast %18 : vector<1x32x32xf32> to vector<32x32xf32>
    %c4 = arith.constant 4 : index
    %c0_26 = arith.constant 0 : index
    %c0_27 = arith.constant 0 : index
    %20 = vector.load %arg9[%c4, %c0_26, %c0_27] : memref<6x32x32xf32, #tpu.memory_space<vmem>>, vector<1x32x32xf32>
    %21 = vector.shape_cast %20 : vector<1x32x32xf32> to vector<32x32xf32>
    %c5 = arith.constant 5 : index
    %c0_28 = arith.constant 0 : index
    %c0_29 = arith.constant 0 : index
    %22 = vector.load %arg9[%c5, %c0_28, %c0_29] : memref<6x32x32xf32, #tpu.memory_space<vmem>>, vector<1x32x32xf32>
    %23 = vector.shape_cast %22 : vector<1x32x32xf32> to vector<32x32xf32>
    %cst = arith.constant dense<0.000000e+00> : vector<8x32xf32>
    %24 = tpu.matmul %1, %13, %cst {dimension_numbers = #tpu.dot_dimension_numbers<[1], [0], [0], [1], [0, 0, 1, 1], [], []>} : vector<8x32xf32>, vector<32x32xf32>, vector<8x32xf32> -> vector<8x32xf32>
    %cst_30 = arith.constant dense<0.000000e+00> : vector<4x32xf32>
    %25 = tpu.matmul %3, %15, %cst_30 {dimension_numbers = #tpu.dot_dimension_numbers<[1], [0], [0], [1], [0, 0, 1, 1], [], []>} : vector<4x32xf32>, vector<32x32xf32>, vector<4x32xf32> -> vector<4x32xf32>
    %cst_31 = arith.constant dense<0.000000e+00> : vector<8x32xf32>
    %26 = tpu.matmul %1, %17, %cst_31 {dimension_numbers = #tpu.dot_dimension_numbers<[1], [0], [0], [1], [0, 0, 1, 1], [], []>} : vector<8x32xf32>, vector<32x32xf32>, vector<8x32xf32> -> vector<8x32xf32>
    %cst_32 = arith.constant dense<0.000000e+00> : vector<4x32xf32>
    %27 = tpu.matmul %3, %19, %cst_32 {dimension_numbers = #tpu.dot_dimension_numbers<[1], [0], [0], [1], [0, 0, 1, 1], [], []>} : vector<4x32xf32>, vector<32x32xf32>, vector<4x32xf32> -> vector<4x32xf32>
    %cst_33 = arith.constant dense<0.000000e+00> : vector<8x4xf32>
    %28 = tpu.matmul %24, %25, %cst_33 {dimension_numbers = #tpu.dot_dimension_numbers<[1], [1], [0], [0], [0, 0, 1, 0], [], []>} : vector<8x32xf32>, vector<4x32xf32>, vector<8x4xf32> -> vector<8x4xf32>
    %cst_34 = arith.constant dense<0.000000e+00> : vector<4x8xf32>
    %29 = tpu.matmul %25, %24, %cst_34 {dimension_numbers = #tpu.dot_dimension_numbers<[1], [1], [0], [0], [0, 0, 1, 0], [], []>} : vector<4x32xf32>, vector<8x32xf32>, vector<4x8xf32> -> vector<4x8xf32>
    %cst_35 = arith.constant 5.000000e-01 : f32
    %30 = vector.broadcast %cst_35 : f32 to vector<1x4xf32>
    %31 = arith.cmpf ogt, %9, %30 : vector<1x4xf32>
    %cst_36 = arith.constant 0.176776692 : f32
    %32 = vector.broadcast %cst_36 : f32 to vector<8x4xf32>
    %33 = arith.mulf %28, %32 : vector<8x4xf32>
    %cst_37 = arith.constant 0xFF800000 : f32
    %34 = vector.shape_cast %31 : vector<1x4xi1> to vector<1x4xi1>
    %35 = vector.broadcast %34 : vector<1x4xi1> to vector<8x4xi1>
    %36 = vector.broadcast %cst_37 : f32 to vector<8x4xf32>
    %37 = arith.select %35, %36, %33 : vector<8x4xi1>, vector<8x4xf32>
    %cst_38 = arith.constant dense<0xFF800000> : vector<8xf32>
    %38 = vector.multi_reduction <maximumf>, %37, %cst_38 [1] : vector<8x4xf32> to vector<8xf32>
    %39 = vector.shape_cast %38 : vector<8xf32> to vector<8x1xf32>
    %40 = vector.broadcast %39 : vector<8x1xf32> to vector<8x4xf32>
    %41 = arith.subf %37, %40 : vector<8x4xf32>
    %42 = math.exp %41 : vector<8x4xf32>
    %cst_39 = arith.constant dense<0.000000e+00> : vector<8xf32>
    %43 = vector.multi_reduction <add>, %42, %cst_39 [1] : vector<8x4xf32> to vector<8xf32>
    %44 = vector.shape_cast %43 : vector<8xf32> to vector<8x1xf32>
    %45 = vector.broadcast %44 : vector<8x1xf32> to vector<8x4xf32>
    %46 = arith.divf %42, %45 : vector<8x4xf32>
    %cst_40 = arith.constant 5.000000e-01 : f32
    %47 = vector.broadcast %cst_40 : f32 to vector<8x1xf32>
    %48 = arith.cmpf ogt, %7, %47 : vector<8x1xf32>
    %cst_41 = arith.constant 0.000000e+00 : f32
    %49 = vector.shape_cast %48 : vector<8x1xi1> to vector<8x1xi1>
    %50 = vector.broadcast %49 : vector<8x1xi1> to vector<8x4xi1>
    %51 = vector.broadcast %cst_41 : f32 to vector<8x4xf32>
    %52 = arith.select %50, %51, %46 : vector<8x4xi1>, vector<8x4xf32>
    %cst_42 = arith.constant dense<0.000000e+00> : vector<8x32xf32>
    %53 = tpu.matmul %52, %27, %cst_42 {dimension_numbers = #tpu.dot_dimension_numbers<[1], [0], [0], [1], [0, 0, 1, 1], [], []>} : vector<8x4xf32>, vector<4x32xf32>, vector<8x32xf32> -> vector<8x32xf32>
    %cst_43 = arith.constant dense<0.000000e+00> : vector<8x32xf32>
    %54 = tpu.matmul %53, %21, %cst_43 {dimension_numbers = #tpu.dot_dimension_numbers<[1], [0], [0], [1], [0, 0, 1, 1], [], []>} : vector<8x32xf32>, vector<32x32xf32>, vector<8x32xf32> -> vector<8x32xf32>
    %cst_44 = arith.constant 5.000000e-01 : f32
    %55 = vector.broadcast %cst_44 : f32 to vector<1x8xf32>
    %56 = arith.cmpf ogt, %5, %55 : vector<1x8xf32>
    %cst_45 = arith.constant 0.176776692 : f32
    %57 = vector.broadcast %cst_45 : f32 to vector<4x8xf32>
    %58 = arith.mulf %29, %57 : vector<4x8xf32>
    %cst_46 = arith.constant 0xFF800000 : f32
    %59 = vector.shape_cast %56 : vector<1x8xi1> to vector<1x8xi1>
    %60 = vector.broadcast %59 : vector<1x8xi1> to vector<4x8xi1>
    %61 = vector.broadcast %cst_46 : f32 to vector<4x8xf32>
    %62 = arith.select %60, %61, %58 : vector<4x8xi1>, vector<4x8xf32>
    %cst_47 = arith.constant dense<0xFF800000> : vector<4xf32>
    %63 = vector.multi_reduction <maximumf>, %62, %cst_47 [1] : vector<4x8xf32> to vector<4xf32>
    %64 = vector.shape_cast %63 : vector<4xf32> to vector<4x1xf32>
    %65 = vector.broadcast %64 : vector<4x1xf32> to vector<4x8xf32>
    %66 = arith.subf %62, %65 : vector<4x8xf32>
    %67 = math.exp %66 : vector<4x8xf32>
    %cst_48 = arith.constant dense<0.000000e+00> : vector<4xf32>
    %68 = vector.multi_reduction <add>, %67, %cst_48 [1] : vector<4x8xf32> to vector<4xf32>
    %69 = vector.shape_cast %68 : vector<4xf32> to vector<4x1xf32>
    %70 = vector.broadcast %69 : vector<4x1xf32> to vector<4x8xf32>
    %71 = arith.divf %67, %70 : vector<4x8xf32>
    %cst_49 = arith.constant 5.000000e-01 : f32
    %72 = vector.broadcast %cst_49 : f32 to vector<4x1xf32>
    %73 = arith.cmpf ogt, %11, %72 : vector<4x1xf32>
    %cst_50 = arith.constant 0.000000e+00 : f32
    %74 = vector.shape_cast %73 : vector<4x1xi1> to vector<4x1xi1>
    %75 = vector.broadcast %74 : vector<4x1xi1> to vector<4x8xi1>
    %76 = vector.broadcast %cst_50 : f32 to vector<4x8xf32>
    %77 = arith.select %75, %76, %71 : vector<4x8xi1>, vector<4x8xf32>
    %cst_51 = arith.constant dense<0.000000e+00> : vector<4x32xf32>
    %78 = tpu.matmul %77, %26, %cst_51 {dimension_numbers = #tpu.dot_dimension_numbers<[1], [0], [0], [1], [0, 0, 1, 1], [], []>} : vector<4x8xf32>, vector<8x32xf32>, vector<4x32xf32> -> vector<4x32xf32>
    %cst_52 = arith.constant dense<0.000000e+00> : vector<4x32xf32>
    %79 = tpu.matmul %78, %23, %cst_52 {dimension_numbers = #tpu.dot_dimension_numbers<[1], [0], [0], [1], [0, 0, 1, 1], [], []>} : vector<4x32xf32>, vector<32x32xf32>, vector<4x32xf32> -> vector<4x32xf32>
    %c0_53 = arith.constant 0 : index
    %c0_54 = arith.constant 0 : index
    %c0_55 = arith.constant 0 : index
    %80 = vector.load %arg7[%c0_53, %c0_54, %c0_55] : memref<1x8x4xf32, #tpu.memory_space<vmem>>, vector<1x8x4xf32>
    %81 = vector.shape_cast %80 : vector<1x8x4xf32> to vector<8x4xf32>
    %cst_56 = arith.constant 5.000000e-01 : f32
    %82 = vector.broadcast %cst_56 : f32 to vector<1x4xf32>
    %83 = arith.cmpf ogt, %9, %82 : vector<1x4xf32>
    %cst_57 = arith.constant 0.176776692 : f32
    %84 = vector.broadcast %cst_57 : f32 to vector<8x4xf32>
    %85 = arith.mulf %81, %84 : vector<8x4xf32>
    %cst_58 = arith.constant 0xFF800000 : f32
    %86 = vector.shape_cast %83 : vector<1x4xi1> to vector<1x4xi1>
    %87 = vector.broadcast %86 : vector<1x4xi1> to vector<8x4xi1>
    %88 = vector.broadcast %cst_58 : f32 to vector<8x4xf32>
    %89 = arith.select %87, %88, %85 : vector<8x4xi1>, vector<8x4xf32>
    %cst_59 = arith.constant dense<0xFF800000> : vector<8xf32>
    %90 = vector.multi_reduction <maximumf>, %89, %cst_59 [1] : vector<8x4xf32> to vector<8xf32>
    %91 = vector.shape_cast %90 : vector<8xf32> to vector<8x1xf32>
    %92 = vector.broadcast %91 : vector<8x1xf32> to vector<8x4xf32>
    %93 = arith.subf %89, %92 : vector<8x4xf32>
    %94 = math.exp %93 : vector<8x4xf32>
    %cst_60 = arith.constant dense<0.000000e+00> : vector<8xf32>
    %95 = vector.multi_reduction <add>, %94, %cst_60 [1] : vector<8x4xf32> to vector<8xf32>
    %96 = vector.shape_cast %95 : vector<8xf32> to vector<8x1xf32>
    %97 = vector.broadcast %96 : vector<8x1xf32> to vector<8x4xf32>
    %98 = arith.divf %94, %97 : vector<8x4xf32>
    %cst_61 = arith.constant 5.000000e-01 : f32
    %99 = vector.broadcast %cst_61 : f32 to vector<8x1xf32>
    %100 = arith.cmpf ogt, %7, %99 : vector<8x1xf32>
    %cst_62 = arith.constant 0.000000e+00 : f32
    %101 = vector.shape_cast %100 : vector<8x1xi1> to vector<8x1xi1>
    %102 = vector.broadcast %101 : vector<8x1xi1> to vector<8x4xi1>
    %103 = vector.broadcast %cst_62 : f32 to vector<8x4xf32>
    %104 = arith.select %102, %103, %98 : vector<8x4xi1>, vector<8x4xf32>
    %cst_63 = arith.constant dense<0.000000e+00> : vector<8x32xf32>
    %105 = tpu.matmul %104, %27, %cst_63 {dimension_numbers = #tpu.dot_dimension_numbers<[1], [0], [0], [1], [0, 0, 1, 1], [], []>} : vector<8x4xf32>, vector<4x32xf32>, vector<8x32xf32> -> vector<8x32xf32>
    %cst_64 = arith.constant dense<0.000000e+00> : vector<8x32xf32>
    %106 = tpu.matmul %105, %21, %cst_64 {dimension_numbers = #tpu.dot_dimension_numbers<[1], [0], [0], [1], [0, 0, 1, 1], [], []>} : vector<8x32xf32>, vector<32x32xf32>, vector<8x32xf32> -> vector<8x32xf32>
    %c0_65 = arith.constant 0 : index
    %c0_66 = arith.constant 0 : index
    %c0_67 = arith.constant 0 : index
    %107 = vector.load %arg8[%c0_65, %c0_66, %c0_67] : memref<1x4x8xf32, #tpu.memory_space<vmem>>, vector<1x4x8xf32>
    %108 = vector.shape_cast %107 : vector<1x4x8xf32> to vector<4x8xf32>
    %cst_68 = arith.constant 5.000000e-01 : f32
    %109 = vector.broadcast %cst_68 : f32 to vector<1x8xf32>
    %110 = arith.cmpf ogt, %5, %109 : vector<1x8xf32>
    %cst_69 = arith.constant 0.176776692 : f32
    %111 = vector.broadcast %cst_69 : f32 to vector<4x8xf32>
    %112 = arith.mulf %108, %111 : vector<4x8xf32>
    %cst_70 = arith.constant 0xFF800000 : f32
    %113 = vector.shape_cast %110 : vector<1x8xi1> to vector<1x8xi1>
    %114 = vector.broadcast %113 : vector<1x8xi1> to vector<4x8xi1>
    %115 = vector.broadcast %cst_70 : f32 to vector<4x8xf32>
    %116 = arith.select %114, %115, %112 : vector<4x8xi1>, vector<4x8xf32>
    %cst_71 = arith.constant dense<0xFF800000> : vector<4xf32>
    %117 = vector.multi_reduction <maximumf>, %116, %cst_71 [1] : vector<4x8xf32> to vector<4xf32>
    %118 = vector.shape_cast %117 : vector<4xf32> to vector<4x1xf32>
    %119 = vector.broadcast %118 : vector<4x1xf32> to vector<4x8xf32>
    %120 = arith.subf %116, %119 : vector<4x8xf32>
    %121 = math.exp %120 : vector<4x8xf32>
    %cst_72 = arith.constant dense<0.000000e+00> : vector<4xf32>
    %122 = vector.multi_reduction <add>, %121, %cst_72 [1] : vector<4x8xf32> to vector<4xf32>
    %123 = vector.shape_cast %122 : vector<4xf32> to vector<4x1xf32>
    %124 = vector.broadcast %123 : vector<4x1xf32> to vector<4x8xf32>
    %125 = arith.divf %121, %124 : vector<4x8xf32>
    %cst_73 = arith.constant 5.000000e-01 : f32
    %126 = vector.broadcast %cst_73 : f32 to vector<4x1xf32>
    %127 = arith.cmpf ogt, %11, %126 : vector<4x1xf32>
    %cst_74 = arith.constant 0.000000e+00 : f32
    %128 = vector.shape_cast %127 : vector<4x1xi1> to vector<4x1xi1>
    %129 = vector.broadcast %128 : vector<4x1xi1> to vector<4x8xi1>
    %130 = vector.broadcast %cst_74 : f32 to vector<4x8xf32>
    %131 = arith.select %129, %130, %125 : vector<4x8xi1>, vector<4x8xf32>
    %cst_75 = arith.constant dense<0.000000e+00> : vector<4x32xf32>
    %132 = tpu.matmul %131, %26, %cst_75 {dimension_numbers = #tpu.dot_dimension_numbers<[1], [0], [0], [1], [0, 0, 1, 1], [], []>} : vector<4x8xf32>, vector<8x32xf32>, vector<4x32xf32> -> vector<4x32xf32>
    %cst_76 = arith.constant dense<0.000000e+00> : vector<4x32xf32>
    %133 = tpu.matmul %132, %23, %cst_76 {dimension_numbers = #tpu.dot_dimension_numbers<[1], [0], [0], [1], [0, 0, 1, 1], [], []>} : vector<4x32xf32>, vector<32x32xf32>, vector<4x32xf32> -> vector<4x32xf32>
    %134 = arith.addf %54, %1 : vector<8x32xf32>
    %cst_77 = arith.constant dense<0.000000e+00> : vector<8xf32>
    %135 = vector.multi_reduction <add>, %134, %cst_77 [1] : vector<8x32xf32> to vector<8xf32>
    %136 = vector.shape_cast %135 : vector<8xf32> to vector<8x1xf32>
    %cst_78 = arith.constant 3.200000e+01 : f32
    %137 = vector.broadcast %cst_78 : f32 to vector<8x1xf32>
    %138 = arith.divf %136, %137 : vector<8x1xf32>
    %139 = vector.broadcast %138 : vector<8x1xf32> to vector<8x32xf32>
    %140 = arith.subf %134, %139 : vector<8x32xf32>
    %141 = arith.mulf %140, %140 : vector<8x32xf32>
    %cst_79 = arith.constant dense<0.000000e+00> : vector<8xf32>
    %142 = vector.multi_reduction <add>, %141, %cst_79 [1] : vector<8x32xf32> to vector<8xf32>
    %143 = vector.shape_cast %142 : vector<8xf32> to vector<8x1xf32>
    %cst_80 = arith.constant 3.200000e+01 : f32
    %144 = vector.broadcast %cst_80 : f32 to vector<8x1xf32>
    %145 = arith.divf %143, %144 : vector<8x1xf32>
    %cst_81 = arith.constant 9.99999974E-6 : f32
    %146 = vector.broadcast %cst_81 : f32 to vector<8x1xf32>
    %147 = arith.addf %145, %146 : vector<8x1xf32>
    %148 = math.rsqrt %147 : vector<8x1xf32>
    %149 = vector.broadcast %148 : vector<8x1xf32> to vector<8x32xf32>
    %150 = arith.mulf %140, %149 : vector<8x32xf32>
    %c0_82 = arith.constant 0 : index
    %c0_83 = arith.constant 0 : index
    %c0_84 = arith.constant 0 : index
    %151 = vector.load %arg10[%c0_82, %c0_83, %c0_84] : memref<1x8x32xf32, #tpu.memory_space<vmem>>, vector<1x8x32xf32>
    %152 = vector.shape_cast %151 : vector<1x8x32xf32> to vector<8x32xf32>
    %153 = vector.shape_cast %150 : vector<8x32xf32> to vector<1x8x32xf32>
    tpu.vector_store %arg10[%c0_82, %c0_83, %c0_84], %153 {strides = array<i32>} : memref<1x8x32xf32, #tpu.memory_space<vmem>>, vector<1x8x32xf32>,
    %154 = arith.addf %79, %3 : vector<4x32xf32>
    %cst_85 = arith.constant dense<0.000000e+00> : vector<4xf32>
    %155 = vector.multi_reduction <add>, %154, %cst_85 [1] : vector<4x32xf32> to vector<4xf32>
    %156 = vector.shape_cast %155 : vector<4xf32> to vector<4x1xf32>
    %cst_86 = arith.constant 3.200000e+01 : f32
    %157 = vector.broadcast %cst_86 : f32 to vector<4x1xf32>
    %158 = arith.divf %156, %157 : vector<4x1xf32>
    %159 = vector.broadcast %158 : vector<4x1xf32> to vector<4x32xf32>
    %160 = arith.subf %154, %159 : vector<4x32xf32>
    %161 = arith.mulf %160, %160 : vector<4x32xf32>
    %cst_87 = arith.constant dense<0.000000e+00> : vector<4xf32>
    %162 = vector.multi_reduction <add>, %161, %cst_87 [1] : vector<4x32xf32> to vector<4xf32>
    %163 = vector.shape_cast %162 : vector<4xf32> to vector<4x1xf32>
    %cst_88 = arith.constant 3.200000e+01 : f32
    %164 = vector.broadcast %cst_88 : f32 to vector<4x1xf32>
    %165 = arith.divf %163, %164 : vector<4x1xf32>
    %cst_89 = arith.constant 9.99999974E-6 : f32
    %166 = vector.broadcast %cst_89 : f32 to vector<4x1xf32>
    %167 = arith.addf %165, %166 : vector<4x1xf32>
    %168 = math.rsqrt %167 : vector<4x1xf32>
    %169 = vector.broadcast %168 : vector<4x1xf32> to vector<4x32xf32>
    %170 = arith.mulf %160, %169 : vector<4x32xf32>
    %c0_90 = arith.constant 0 : index
    %c0_91 = arith.constant 0 : index
    %c0_92 = arith.constant 0 : index
    %171 = vector.load %arg11[%c0_90, %c0_91, %c0_92] : memref<1x4x32xf32, #tpu.memory_space<vmem>>, vector<1x4x32xf32>
    %172 = vector.shape_cast %171 : vector<1x4x32xf32> to vector<4x32xf32>
    %173 = vector.shape_cast %170 : vector<4x32xf32> to vector<1x4x32xf32>
    tpu.vector_store %arg11[%c0_90, %c0_91, %c0_92], %173 {strides = array<i32>} : memref<1x4x32xf32, #tpu.memory_space<vmem>>, vector<1x4x32xf32>,
    %174 = arith.subf %54, %106 : vector<8x32xf32>
    %175 = arith.addf %174, %1 : vector<8x32xf32>
    %cst_93 = arith.constant dense<0.000000e+00> : vector<8xf32>
    %176 = vector.multi_reduction <add>, %175, %cst_93 [1] : vector<8x32xf32> to vector<8xf32>
    %177 = vector.shape_cast %176 : vector<8xf32> to vector<8x1xf32>
    %cst_94 = arith.constant 3.200000e+01 : f32
    %178 = vector.broadcast %cst_94 : f32 to vector<8x1xf32>
    %179 = arith.divf %177, %178 : vector<8x1xf32>
    %180 = vector.broadcast %179 : vector<8x1xf32> to vector<8x32xf32>
    %181 = arith.subf %175, %180 : vector<8x32xf32>
    %182 = arith.mulf %181, %181 : vector<8x32xf32>
    %cst_95 = arith.constant dense<0.000000e+00> : vector<8xf32>
    %183 = vector.multi_reduction <add>, %182, %cst_95 [1] : vector<8x32xf32> to vector<8xf32>
    %184 = vector.shape_cast %183 : vector<8xf32> to vector<8x1xf32>
    %cst_96 = arith.constant 3.200000e+01 : f32
    %185 = vector.broadcast %cst_96 : f32 to vector<8x1xf32>
    %186 = arith.divf %184, %185 : vector<8x1xf32>
    %cst_97 = arith.constant 9.99999974E-6 : f32
    %187 = vector.broadcast %cst_97 : f32 to vector<8x1xf32>
    %188 = arith.addf %186, %187 : vector<8x1xf32>
    %189 = math.rsqrt %188 : vector<8x1xf32>
    %190 = vector.broadcast %189 : vector<8x1xf32> to vector<8x32xf32>
    %191 = arith.mulf %181, %190 : vector<8x32xf32>
    %c0_98 = arith.constant 0 : index
    %c0_99 = arith.constant 0 : index
    %c0_100 = arith.constant 0 : index
    %192 = vector.load %arg12[%c0_98, %c0_99, %c0_100] : memref<1x8x32xf32, #tpu.memory_space<vmem>>, vector<1x8x32xf32>
    %193 = vector.shape_cast %192 : vector<1x8x32xf32> to vector<8x32xf32>
    %194 = vector.shape_cast %191 : vector<8x32xf32> to vector<1x8x32xf32>
    tpu.vector_store %arg12[%c0_98, %c0_99, %c0_100], %194 {strides = array<i32>} : memref<1x8x32xf32, #tpu.memory_space<vmem>>, vector<1x8x32xf32>,
    %195 = arith.subf %79, %133 : vector<4x32xf32>
    %196 = arith.addf %195, %3 : vector<4x32xf32>
    %cst_101 = arith.constant dense<0.000000e+00> : vector<4xf32>
    %197 = vector.multi_reduction <add>, %196, %cst_101 [1] : vector<4x32xf32> to vector<4xf32>
    %198 = vector.shape_cast %197 : vector<4xf32> to vector<4x1xf32>
    %cst_102 = arith.constant 3.200000e+01 : f32
    %199 = vector.broadcast %cst_102 : f32 to vector<4x1xf32>
    %200 = arith.divf %198, %199 : vector<4x1xf32>
    %201 = vector.broadcast %200 : vector<4x1xf32> to vector<4x32xf32>
    %202 = arith.subf %196, %201 : vector<4x32xf32>
    %203 = arith.mulf %202, %202 : vector<4x32xf32>
    %cst_103 = arith.constant dense<0.000000e+00> : vector<4xf32>
    %204 = vector.multi_reduction <add>, %203, %cst_103 [1] : vector<4x32xf32> to vector<4xf32>
    %205 = vector.shape_cast %204 : vector<4xf32> to vector<4x1xf32>
    %cst_104 = arith.constant 3.200000e+01 : f32
    %206 = vector.broadcast %cst_104 : f32 to vector<4x1xf32>
    %207 = arith.divf %205, %206 : vector<4x1xf32>
    %cst_105 = arith.constant 9.99999974E-6 : f32
    %208 = vector.broadcast %cst_105 : f32 to vector<4x1xf32>
    %209 = arith.addf %207, %208 : vector<4x1xf32>
    %210 = math.rsqrt %209 : vector<4x1xf32>
    %211 = vector.broadcast %210 : vector<4x1xf32> to vector<4x32xf32>
    %212 = arith.mulf %202, %211 : vector<4x32xf32>
    %c0_106 = arith.constant 0 : index
    %c0_107 = arith.constant 0 : index
    %c0_108 = arith.constant 0 : index
    %213 = vector.load %arg13[%c0_106, %c0_107, %c0_108] : memref<1x4x32xf32, #tpu.memory_space<vmem>>, vector<1x4x32xf32>
    %214 = vector.shape_cast %213 : vector<1x4x32xf32> to vector<4x32xf32>
    %215 = vector.shape_cast %212 : vector<4x32xf32> to vector<1x4x32xf32>
    tpu.vector_store %arg13[%c0_106, %c0_107, %c0_108], %215 {strides = array<i32>} : memref<1x4x32xf32, #tpu.memory_space<vmem>>, vector<1x4x32xf32>,
    return
  }
  func.func @transform_0(%arg0: i32) -> (i32, i32, i32) {
    %c0_i32 = arith.constant 0 : i32
    %c0_i32_0 = arith.constant 0 : i32
    %c0_i32_1 = arith.constant 0 : i32
    return %arg0, %c0_i32, %c0_i32_0 : i32, i32, i32
  }
  func.func @transform_1(%arg0: i32) -> (i32, i32, i32) {
    %c0_i32 = arith.constant 0 : i32
    %c0_i32_0 = arith.constant 0 : i32
    %c0_i32_1 = arith.constant 0 : i32
    return %arg0, %c0_i32, %c0_i32_0 : i32, i32, i32
  }
  func.func @transform_2(%arg0: i32) -> (i32, i32, i32) {
    %c0_i32 = arith.constant 0 : i32
    %c0_i32_0 = arith.constant 0 : i32
    %c0_i32_1 = arith.constant 0 : i32
    return %arg0, %c0_i32, %c0_i32_0 : i32, i32, i32
  }
  func.func @transform_3(%arg0: i32) -> (i32, i32, i32) {
    %c0_i32 = arith.constant 0 : i32
    %c0_i32_0 = arith.constant 0 : i32
    %c0_i32_1 = arith.constant 0 : i32
    return %arg0, %c0_i32, %c0_i32_0 : i32, i32, i32
  }
  func.func @transform_4(%arg0: i32) -> (i32, i32, i32) {
    %c0_i32 = arith.constant 0 : i32
    %c0_i32_0 = arith.constant 0 : i32
    %c0_i32_1 = arith.constant 0 : i32
    return %arg0, %c0_i32, %c0_i32_0 : i32, i32, i32
  }
  func.func @transform_5(%arg0: i32) -> (i32, i32, i32) {
    %c0_i32 = arith.constant 0 : i32
    %c0_i32_0 = arith.constant 0 : i32
    %c0_i32_1 = arith.constant 0 : i32
    return %arg0, %c0_i32, %c0_i32_0 : i32, i32, i32
  }
  func.func @transform_6(%arg0: i32) -> (i32, i32, i32) {
    %c0_i32 = arith.constant 0 : i32
    %c0_i32_0 = arith.constant 0 : i32
    %c0_i32_1 = arith.constant 0 : i32
    return %arg0, %c0_i32, %c0_i32_0 : i32, i32, i32
  }
  func.func @transform_7(%arg0: i32) -> (i32, i32, i32) {
    %c0_i32 = arith.constant 0 : i32
    %c0_i32_0 = arith.constant 0 : i32
    %c0_i32_1 = arith.constant 0 : i32
    return %arg0, %c0_i32, %c0_i32_0 : i32, i32, i32
  }
  func.func @transform_8(%arg0: i32) -> (i32, i32, i32) {
    %c0_i32 = arith.constant 0 : i32
    %c0_i32_0 = arith.constant 0 : i32
    %c0_i32_1 = arith.constant 0 : i32
    %c0_i32_2 = arith.constant 0 : i32
    return %c0_i32, %c0_i32_0, %c0_i32_1 : i32, i32, i32
  }
  func.func @transform_9(%arg0: i32) -> (i32, i32, i32) {
    %c0_i32 = arith.constant 0 : i32
    %c0_i32_0 = arith.constant 0 : i32
    %c0_i32_1 = arith.constant 0 : i32
    return %arg0, %c0_i32, %c0_i32_0 : i32, i32, i32
  }
  func.func @transform_10(%arg0: i32) -> (i32, i32, i32) {
    %c0_i32 = arith.constant 0 : i32
    %c0_i32_0 = arith.constant 0 : i32
    %c0_i32_1 = arith.constant 0 : i32
    return %arg0, %c0_i32, %c0_i32_0 : i32, i32, i32
  }
  func.func @transform_11(%arg0: i32) -> (i32, i32, i32) {
    %c0_i32 = arith.constant 0 : i32
    %c0_i32_0 = arith.constant 0 : i32
    %c0_i32_1 = arith.constant 0 : i32
    return %arg0, %c0_i32, %c0_i32_0 : i32, i32, i32
  }
  func.func @transform_12(%arg0: i32) -> (i32, i32, i32) {
    %c0_i32 = arith.constant 0 : i32
    %c0_i32_0 = arith.constant 0 : i32
    %c0_i32_1 = arith.constant 0 : i32
    return %arg0, %c0_i32, %c0_i32_0 : i32, i32, i32
  }
}

</mosaic_0001>

<llo_original>
// kernel: tpu_custom_call.1
$region0: #{tpu_custom_call.1}
  #allocation0 [shape = 'u32[]', space=smem, size = 0x4, offset = 0x4, fixed_abs, tag = 'smem constant byte address 0x4 - core index']
  #allocation1 [shape = 'u32[72,128]{1,0:T(1,128)}', space=vmem, size = 0x9000, scoped, tag = 'internal scratch']
  %s0 = inlined_call_operand.vmem [shape: f32[2,8,32], index: 0, kind: input, shape index: {}]
  %s1 = inlined_call_operand.vmem [shape: f32[2,4,32], index: 1, kind: input, shape index: {}]
  %s2 = inlined_call_operand.vmem [shape: f32[2,1,8], index: 2, kind: input, shape index: {}]
  %s3 = inlined_call_operand.vmem [shape: f32[2,8,1], index: 3, kind: input, shape index: {}]
  %s4 = inlined_call_operand.vmem [shape: f32[2,1,4], index: 4, kind: input, shape index: {}]
  %s5 = inlined_call_operand.vmem [shape: f32[2,4,1], index: 5, kind: input, shape index: {}]
  %s6 = inlined_call_operand.vmem [shape: f32[2,8,4], index: 6, kind: input, shape index: {}]
  %s7 = inlined_call_operand.vmem [shape: f32[2,4,8], index: 7, kind: input, shape index: {}]
  %s8 = inlined_call_operand.hbm [shape: f32[6,32,32], index: 8, kind: input, shape index: {}]
  %s9 = inlined_call_operand.hbm [shape: f32[2,8,32], index: 9, kind: output, shape index: {0}]
  %s10 = inlined_call_operand.hbm [shape: f32[2,4,32], index: 10, kind: output, shape index: {1}]
  %s11 = inlined_call_operand.hbm [shape: f32[2,8,32], index: 11, kind: output, shape index: {2}]
  %s12 = inlined_call_operand.hbm [shape: f32[2,4,32], index: 12, kind: output, shape index: {3}]
  %13 = xla_tuple %s9, %s10, %s11, %s12
  %s14 = sld [smem:[#allocation0]]
  $region97: #{tpu_custom_call.1} parent=0
    _
  %s16 = ssub.s32 1, %s14
  %s17 = scalar_select 0, %s16, %s14
  $region1: #{tpu_custom_call.1} parent=0
    #allocation2 [shape = 'u8[98304]{0}', space=vmem, size = 0x18000, scoped, tag = 'input window, operand 8, single buffered']
    #allocation3 [shape = 's32[2]{0}', space=sflag, size = 0x8, scoped, tag = 'scoped memory for tpu_custom_call.1']
    #allocation4 [shape = 's32[2]{0}', space=sflag, size = 0x8, scoped, tag = 'scoped memory for tpu_custom_call.1']
    #allocation5 [shape = 'u8[8192]{0}', space=vmem, size = 0x2000, scoped, tag = 'output window, operand 0']
    #allocation6 [shape = 'u8[4096]{0}', space=vmem, size = 0x1000, scoped, tag = 'output window, operand 1']
    #allocation7 [shape = 's32[2]{0}', space=sflag, size = 0x8, scoped, tag = 'scoped memory for tpu_custom_call.1']
    #allocation8 [shape = 'u8[8192]{0}', space=vmem, size = 0x2000, scoped, tag = 'output window, operand 2']
    #allocation9 [shape = 'u8[4096]{0}', space=vmem, size = 0x1000, scoped, tag = 'output window, operand 3']
    #allocation10 [shape = 's32[2]{0}', space=sflag, size = 0x8, scoped, tag = 'scoped memory for tpu_custom_call.1']
    %18 = vsyncpa [#allocation3], 0
    %19 = vsyncpa [#allocation4], 0
    %s20 = scalar_lea.sflag [#allocation4], 1
    %21 = vsyncpa %s20, 0
    %22 = vsyncpa [#allocation7], 0
    %s23 = scalar_lea.sflag [#allocation7], 1
    %24 = vsyncpa %s23, 0
    %25 = vsyncpa [#allocation10], 0
    %s26 = scalar_lea.sflag [#allocation10], 1
    %27 = vsyncpa %s26, 0
    loop: start=0, step=1, limit=4
    $region2: #{tpu_custom_call.1} parent=1 // loop_pre_header
      _
    $region3: #{tpu_custom_call.1} parent=1 // loop_header
      %s29 = sphi 0, %s33
      %p30 = scmp.ge.s32.totalorder %s29, 4
      %s39 = sphi 0, %s41
      %s42 = sphi 0, %s39
      %s43 = sphi 0, %s42
      %s59 = sphi 0, %s43
      %s65 = sphi 0, %s67
      %s68 = sphi 0, %s65
      %s69 = sphi 0, %s68
      %s85 = sphi 0, %s69
      %s91 = sphi 0, %s93
      %s94 = sphi 0, %s91
      %s95 = sphi 0, %s94
      %s111 = sphi 0, %s95
      %s117 = sphi 0, %s119
      %s120 = sphi 0, %s117
      %s121 = sphi 0, %s120
      %s137 = sphi 0, %s121
      %s143 = sphi 0, %s145
      %s146 = sphi 0, %s143
      %s147 = sphi 0, %s146
      %s163 = sphi 0, %s147
      %s169 = sphi 0, %s171
      %s172 = sphi 0, %s169
      %s173 = sphi 0, %s172
      %s189 = sphi 0, %s173
      %s195 = sphi 0, %s197
      %s198 = sphi 0, %s195
      %s199 = sphi 0, %s198
      %s215 = sphi 0, %s199
      %s221 = sphi 0, %s223
      %s224 = sphi 0, %s221
      %s225 = sphi 0, %s224
      %s241 = sphi 0, %s225
      %s245 = sphi 0, %s245
      %s247 = sphi 0, %s245
      %s248 = sphi 0, %s247
      %s262 = sphi 0, %s248
      %s268 = sphi 0, %s270
      %s271 = sphi 0, %s268
      %s272 = sphi 0, %s271
      %s288 = sphi 0, %s272
      %s294 = sphi 0, %s296
      %s297 = sphi 0, %s294
      %s298 = sphi 0, %s297
      %s314 = sphi 0, %s298
      %s320 = sphi 0, %s322
      %s323 = sphi 0, %s320
      %s324 = sphi 0, %s323
      %s340 = sphi 0, %s324
      %s346 = sphi 0, %s348
      %s349 = sphi 0, %s346
      %s350 = sphi 0, %s349
      %s366 = sphi 0, %s350
    $region4: #{tpu_custom_call.1} parent=1 // loop_header_branch
      %32 = sbr.rel (%p30) target = $region8
    $region5: #{tpu_custom_call.1} parent=1 // loop_body
      %s34 = ssub.s32 %s29, 1
      %s35 = ssub.s32 %s29, 2
      %s36 = sadd.s32 %s29, 1
      %s37 = ssub.s32 %s29, %s36
      %p38 = scmp.eq.s32.totalorder %s37, 0
      %s40 = sadd.s32 %s39, 1
      %s41 = scalar_select %p38, %s39, %s40
      %p44 = pneg %p38
      %p45 = scmp.eq.s32.totalorder %s29, 1
      %p46 = por %p44, %p45
      %p47 = scmp.ne.s32.totalorder %s39, %s42
      %p48 = scmp.eq.s32.totalorder %s29, 0
      %p49 = por %p47, %p48
      %p50 = scmp.ne.s32.totalorder %s39, %s42
      %p51 = scmp.eq.s32.totalorder %s34, 1
      %p52 = por %p50, %p51
      %p53 = scmp.ne.s32.totalorder %s42, %s43
      %p54 = scmp.eq.s32.totalorder %s34, 0
      %p55 = por %p53, %p54
      %p56 = scmp.ne.s32.totalorder %s42, %s43
      %p57 = scmp.eq.s32.totalorder %s35, 1
      %p58 = por %p56, %p57
      %p60 = scmp.ne.s32.totalorder %s43, %s59
      %p61 = scmp.eq.s32.totalorder %s35, 0
      %p62 = por %p60, %p61
      %s63 = ssub.s32 %s29, %s36
      %p64 = scmp.eq.s32.totalorder %s63, 0
      %s66 = sadd.s32 %s65, 1
      %s67 = scalar_select %p64, %s65, %s66
      %p70 = pneg %p64
      %p71 = scmp.eq.s32.totalorder %s29, 1
      %p72 = por %p70, %p71
      %p73 = scmp.ne.s32.totalorder %s65, %s68
      %p74 = scmp.eq.s32.totalorder %s29, 0
      %p75 = por %p73, %p74
      %p76 = scmp.ne.s32.totalorder %s65, %s68
      %p77 = scmp.eq.s32.totalorder %s34, 1
      %p78 = por %p76, %p77
      %p79 = scmp.ne.s32.totalorder %s68, %s69
      %p80 = scmp.eq.s32.totalorder %s34, 0
      %p81 = por %p79, %p80
      %p82 = scmp.ne.s32.totalorder %s68, %s69
      %p83 = scmp.eq.s32.totalorder %s35, 1
      %p84 = por %p82, %p83
      %p86 = scmp.ne.s32.totalorder %s69, %s85
      %p87 = scmp.eq.s32.totalorder %s35, 0
      %p88 = por %p86, %p87
      %s89 = ssub.s32 %s29, %s36
      %p90 = scmp.eq.s32.totalorder %s89, 0
      %s92 = sadd.s32 %s91, 1
      %s93 = scalar_select %p90, %s91, %s92
      %p96 = pneg %p90
      %p97 = scmp.eq.s32.totalorder %s29, 1
      %p98 = por %p96, %p97
      %p99 = scmp.ne.s32.totalorder %s91, %s94
      %p100 = scmp.eq.s32.totalorder %s29, 0
      %p101 = por %p99, %p100
      %p102 = scmp.ne.s32.totalorder %s91, %s94
      %p103 = scmp.eq.s32.totalorder %s34, 1
      %p104 = por %p102, %p103
      %p105 = scmp.ne.s32.totalorder %s94, %s95
      %p106 = scmp.eq.s32.totalorder %s34, 0
      %p107 = por %p105, %p106
      %p108 = scmp.ne.s32.totalorder %s94, %s95
      %p109 = scmp.eq.s32.totalorder %s35, 1
      %p110 = por %p108, %p109
      %p112 = scmp.ne.s32.totalorder %s95, %s111
      %p113 = scmp.eq.s32.totalorder %s35, 0
      %p114 = por %p112, %p113
      %s115 = ssub.s32 %s29, %s36
      %p116 = scmp.eq.s32.totalorder %s115, 0
      %s118 = sadd.s32 %s117, 1
      %s119 = scalar_select %p116, %s117, %s118
      %p122 = pneg %p116
      %p123 = scmp.eq.s32.totalorder %s29, 1
      %p124 = por %p122, %p123
      %p125 = scmp.ne.s32.totalorder %s117, %s120
      %p126 = scmp.eq.s32.totalorder %s29, 0
      %p127 = por %p125, %p126
      %p128 = scmp.ne.s32.totalorder %s117, %s120
      %p129 = scmp.eq.s32.totalorder %s34, 1
      %p130 = por %p128, %p129
      %p131 = scmp.ne.s32.totalorder %s120, %s121
      %p132 = scmp.eq.s32.totalorder %s34, 0
      %p133 = por %p131, %p132
      %p134 = scmp.ne.s32.totalorder %s120, %s121
      %p135 = scmp.eq.s32.totalorder %s35, 1
      %p136 = por %p134, %p135
      %p138 = scmp.ne.s32.totalorder %s121, %s137
      %p139 = scmp.eq.s32.totalorder %s35, 0
      %p140 = por %p138, %p139
      %s141 = ssub.s32 %s29, %s36
      %p142 = scmp.eq.s32.totalorder %s141, 0
      %s144 = sadd.s32 %s143, 1
      %s145 = scalar_select %p142, %s143, %s144
      %p148 = pneg %p142
      %p149 = scmp.eq.s32.totalorder %s29, 1
      %p150 = por %p148, %p149
      %p151 = scmp.ne.s32.totalorder %s143, %s146
      %p152 = scmp.eq.s32.totalorder %s29, 0
      %p153 = por %p151, %p152
      %p154 = scmp.ne.s32.totalorder %s143, %s146
      %p155 = scmp.eq.s32.totalorder %s34, 1
      %p156 = por %p154, %p155
      %p157 = scmp.ne.s32.totalorder %s146, %s147
      %p158 = scmp.eq.s32.totalorder %s34, 0
      %p159 = por %p157, %p158
      %p160 = scmp.ne.s32.totalorder %s146, %s147
      %p161 = scmp.eq.s32.totalorder %s35, 1
      %p162 = por %p160, %p161
      %p164 = scmp.ne.s32.totalorder %s147, %s163
      %p165 = scmp.eq.s32.totalorder %s35, 0
      %p166 = por %p164, %p165
      %s167 = ssub.s32 %s29, %s36
      %p168 = scmp.eq.s32.totalorder %s167, 0
      %s170 = sadd.s32 %s169, 1
      %s171 = scalar_select %p168, %s169, %s170
      %p174 = pneg %p168
      %p175 = scmp.eq.s32.totalorder %s29, 1
      %p176 = por %p174, %p175
      %p177 = scmp.ne.s32.totalorder %s169, %s172
      %p178 = scmp.eq.s32.totalorder %s29, 0
      %p179 = por %p177, %p178
      %p180 = scmp.ne.s32.totalorder %s169, %s172
      %p181 = scmp.eq.s32.totalorder %s34, 1
      %p182 = por %p180, %p181
      %p183 = scmp.ne.s32.totalorder %s172, %s173
      %p184 = scmp.eq.s32.totalorder %s34, 0
      %p185 = por %p183, %p184
      %p186 = scmp.ne.s32.totalorder %s172, %s173
      %p187 = scmp.eq.s32.totalorder %s35, 1
      %p188 = por %p186, %p187
      %p190 = scmp.ne.s32.totalorder %s173, %s189
      %p191 = scmp.eq.s32.totalorder %s35, 0
      %p192 = por %p190, %p191
      %s193 = ssub.s32 %s29, %s36
      %p194 = scmp.eq.s32.totalorder %s193, 0
      %s196 = sadd.s32 %s195, 1
      %s197 = scalar_select %p194, %s195, %s196
      %p200 = pneg %p194
      %p201 = scmp.eq.s32.totalorder %s29, 1
      %p202 = por %p200, %p201
      %p203 = scmp.ne.s32.totalorder %s195, %s198
      %p204 = scmp.eq.s32.totalorder %s29, 0
      %p205 = por %p203, %p204
      %p206 = scmp.ne.s32.totalorder %s195, %s198
      %p207 = scmp.eq.s32.totalorder %s34, 1
      %p208 = por %p206, %p207
      %p209 = scmp.ne.s32.totalorder %s198, %s199
      %p210 = scmp.eq.s32.totalorder %s34, 0
      %p211 = por %p209, %p210
      %p212 = scmp.ne.s32.totalorder %s198, %s199
      %p213 = scmp.eq.s32.totalorder %s35, 1
      %p214 = por %p212, %p213
      %p216 = scmp.ne.s32.totalorder %s199, %s215
      %p217 = scmp.eq.s32.totalorder %s35, 0
      %p218 = por %p216, %p217
      %s219 = ssub.s32 %s29, %s36
      %p220 = scmp.eq.s32.totalorder %s219, 0
      %s222 = sadd.s32 %s221, 1
      %s223 = scalar_select %p220, %s221, %s222
      %p226 = pneg %p220
      %p227 = scmp.eq.s32.totalorder %s29, 1
      %p228 = por %p226, %p227
      %p229 = scmp.ne.s32.totalorder %s221, %s224
      %p230 = scmp.eq.s32.totalorder %s29, 0
      %p231 = por %p229, %p230
      %p232 = scmp.ne.s32.totalorder %s221, %s224
      %p233 = scmp.eq.s32.totalorder %s34, 1
      %p234 = por %p232, %p233
      %p235 = scmp.ne.s32.totalorder %s224, %s225
      %p236 = scmp.eq.s32.totalorder %s34, 0
      %p237 = por %p235, %p236
      %p238 = scmp.ne.s32.totalorder %s224, %s225
      %p239 = scmp.eq.s32.totalorder %s35, 1
      %p240 = por %p238, %p239
      %p242 = scmp.ne.s32.totalorder %s225, %s241
      %p243 = scmp.eq.s32.totalorder %s35, 0
      %p244 = por %p242, %p243
      %s246 = sadd.s32 %s245, 1
      %p249 = scmp.eq.s32.totalorder %s29, 1
      %p250 = scmp.ne.s32.totalorder %s245, %s247
      %p251 = scmp.eq.s32.totalorder %s29, 0
      %p252 = por %p250, %p251
      %p253 = scmp.ne.s32.totalorder %s245, %s247
      %p254 = scmp.eq.s32.totalorder %s34, 1
      %p255 = por %p253, %p254
      %p256 = scmp.ne.s32.totalorder %s247, %s248
      %p257 = scmp.eq.s32.totalorder %s34, 0
      %p258 = por %p256, %p257
      %p259 = scmp.ne.s32.totalorder %s247, %s248
      %p260 = scmp.eq.s32.totalorder %s35, 1
      %p261 = por %p259, %p260
      %p263 = scmp.ne.s32.totalorder %s248, %s262
      %p264 = scmp.eq.s32.totalorder %s35, 0
      %p265 = por %p263, %p264
      %s266 = ssub.s32 %s29, %s36
      %p267 = scmp.eq.s32.totalorder %s266, 0
      %s269 = sadd.s32 %s268, 1
      %s270 = scalar_select %p267, %s268, %s269
      %p273 = pneg %p267
      %p274 = scmp.eq.s32.totalorder %s29, 1
      %p275 = por %p273, %p274
      %p276 = scmp.ne.s32.totalorder %s268, %s271
      %p277 = scmp.eq.s32.totalorder %s29, 0
      %p278 = por %p276, %p277
      %p279 = scmp.ne.s32.totalorder %s268, %s271
      %p280 = scmp.eq.s32.totalorder %s34, 1
      %p281 = por %p279, %p280
      %p282 = scmp.ne.s32.totalorder %s271, %s272
      %p283 = scmp.eq.s32.totalorder %s34, 0
      %p284 = por %p282, %p283
      %p285 = scmp.ne.s32.totalorder %s271, %s272
      %p286 = scmp.eq.s32.totalorder %s35, 1
      %p287 = por %p285, %p286
      %p289 = scmp.ne.s32.totalorder %s272, %s288
      %p290 = scmp.eq.s32.totalorder %s35, 0
      %p291 = por %p289, %p290
      %s292 = ssub.s32 %s29, %s36
      %p293 = scmp.eq.s32.totalorder %s292, 0
      %s295 = sadd.s32 %s294, 1
      %s296 = scalar_select %p293, %s294, %s295
      %p299 = pneg %p293
      %p300 = scmp.eq.s32.totalorder %s29, 1
      %p301 = por %p299, %p300
      %p302 = scmp.ne.s32.totalorder %s294, %s297
      %p303 = scmp.eq.s32.totalorder %s29, 0
      %p304 = por %p302, %p303
      %p305 = scmp.ne.s32.totalorder %s294, %s297
      %p306 = scmp.eq.s32.totalorder %s34, 1
      %p307 = por %p305, %p306
      %p308 = scmp.ne.s32.totalorder %s297, %s298
      %p309 = scmp.eq.s32.totalorder %s34, 0
      %p310 = por %p308, %p309
      %p311 = scmp.ne.s32.totalorder %s297, %s298
      %p312 = scmp.eq.s32.totalorder %s35, 1
      %p313 = por %p311, %p312
      %p315 = scmp.ne.s32.totalorder %s298, %s314
      %p316 = scmp.eq.s32.totalorder %s35, 0
      %p317 = por %p315, %p316
      %s318 = ssub.s32 %s29, %s36
      %p319 = scmp.eq.s32.totalorder %s318, 0
      %s321 = sadd.s32 %s320, 1
      %s322 = scalar_select %p319, %s320, %s321
      %p325 = pneg %p319
      %p326 = scmp.eq.s32.totalorder %s29, 1
      %p327 = por %p325, %p326
      %p328 = scmp.ne.s32.totalorder %s320, %s323
      %p329 = scmp.eq.s32.totalorder %s29, 0
      %p330 = por %p328, %p329
      %p331 = scmp.ne.s32.totalorder %s320, %s323
      %p332 = scmp.eq.s32.totalorder %s34, 1
      %p333 = por %p331, %p332
      %p334 = scmp.ne.s32.totalorder %s323, %s324
      %p335 = scmp.eq.s32.totalorder %s34, 0
      %p336 = por %p334, %p335
      %p337 = scmp.ne.s32.totalorder %s323, %s324
      %p338 = scmp.eq.s32.totalorder %s35, 1
      %p339 = por %p337, %p338
      %p341 = scmp.ne.s32.totalorder %s324, %s340
      %p342 = scmp.eq.s32.totalorder %s35, 0
      %p343 = por %p341, %p342
      %s344 = ssub.s32 %s29, %s36
      %p345 = scmp.eq.s32.totalorder %s344, 0
      %s347 = sadd.s32 %s346, 1
      %s348 = scalar_select %p345, %s346, %s347
      %p351 = pneg %p345
      %p352 = scmp.eq.s32.totalorder %s29, 1
      %p353 = por %p351, %p352
      %p354 = scmp.ne.s32.totalorder %s346, %s349
      %p355 = scmp.eq.s32.totalorder %s29, 0
      %p356 = por %p354, %p355
      %p357 = scmp.ne.s32.totalorder %s346, %s349
      %p358 = scmp.eq.s32.totalorder %s34, 1
      %p359 = por %p357, %p358
      %p360 = scmp.ne.s32.totalorder %s349, %s350
      %p361 = scmp.eq.s32.totalorder %s34, 0
      %p362 = por %p360, %p361
      %p363 = scmp.ne.s32.totalorder %s349, %s350
      %p364 = scmp.eq.s32.totalorder %s35, 1
      %p365 = por %p363, %p364
      %p367 = scmp.ne.s32.totalorder %s350, %s366
      %p368 = scmp.eq.s32.totalorder %s35, 0
      %p369 = por %p367, %p368
      %p370 = scmp.le.s32.totalorder 1, %s29
      %p371 = scmp.lt.s32.totalorder %s29, 3
      %p372 = pnand %p370, %p371
      %p373 = pneg %p372
      // Predicated region
      $region9: #{tpu_custom_call.1} parent=5 // pred_check
        _
      $region10: #{tpu_custom_call.1} parent=5 // pred_check_branch
        %375 = sbr.rel (%p372) target = $region12
      $region11: #{tpu_custom_call.1} parent=5 // pred_region
        %s376 = ssub.s32 %s29, 1
        // Predicated region
        $region13: #{tpu_custom_call.1} parent=11 // pred_check
          %p377 = pneg %p258
        $region14: #{tpu_custom_call.1} parent=11 // pred_check_branch
          %379 = sbr.rel (%p377) target = $region16
        $region15: #{tpu_custom_call.1} parent=11 // pred_region
          %381 = vsyncadd [#allocation3], 0
          %s382 = sshll.u32 %s8, 4
          %s383 = int_to_ptr.hbm [resolvable:$true] %s382
          %s384 = sshll.u32 [#allocation2], 4
          %s385 = int_to_ptr.vmem [resolvable:$true] %s384
          %390 = dma.hbm_to_vmem [thread:$0]  %s383, 3072, %s385, [#allocation3], 128, 128, 8
        $region16: #{tpu_custom_call.1} parent=11 // pred_fallthru
          _
      $region12: #{tpu_custom_call.1} parent=5 // pred_fallthru
        _
      %p391 = scmp.lt.s32.totalorder %s29, 2
      // Predicated region
      $region17: #{tpu_custom_call.1} parent=5 // pred_check
        %p392 = pneg %p391
      $region18: #{tpu_custom_call.1} parent=5 // pred_check_branch
        %394 = sbr.rel (%p392) target = $region20
      $region19: #{tpu_custom_call.1} parent=5 // pred_region
        // Predicated region
        $region21: #{tpu_custom_call.1} parent=19 // pred_check
          %p395 = pneg %p49
        $region22: #{tpu_custom_call.1} parent=19 // pred_check_branch
          %397 = sbr.rel (%p395) target = $region24
        $region23: #{tpu_custom_call.1} parent=19 // pred_region
          %p398 = scmp.lt.s32.totalorder %s29, 1
          %s399 = scalar_select %p398, %s29, 1
          %s400 = smul.addr %s399, 8
          %s401 = scalar_lea.vmem %s0, %s400
        $region24: #{tpu_custom_call.1} parent=19 // pred_fallthru
          _
        // Predicated region
        $region25: #{tpu_custom_call.1} parent=19 // pred_check
          %p402 = pneg %p75
        $region26: #{tpu_custom_call.1} parent=19 // pred_check_branch
          %404 = sbr.rel (%p402) target = $region28
        $region27: #{tpu_custom_call.1} parent=19 // pred_region
          %p405 = scmp.lt.s32.totalorder %s29, 1
          %s406 = scalar_select %p405, %s29, 1
          %s407 = smul.addr %s406, 4
          %s408 = scalar_lea.vmem %s1, %s407
        $region28: #{tpu_custom_call.1} parent=19 // pred_fallthru
          _
        // Predicated region
        $region29: #{tpu_custom_call.1} parent=19 // pred_check
          %p409 = pneg %p101
        $region30: #{tpu_custom_call.1} parent=19 // pred_check_branch
          %411 = sbr.rel (%p409) target = $region32
        $region31: #{tpu_custom_call.1} parent=19 // pred_region
          %p412 = scmp.lt.s32.totalorder %s29, 1
          %s413 = scalar_select %p412, %s29, 1
          %s414 = scalar_lea.vmem %s2, %s413
        $region32: #{tpu_custom_call.1} parent=19 // pred_fallthru
          _
        // Predicated region
        $region33: #{tpu_custom_call.1} parent=19 // pred_check
          %p415 = pneg %p127
        $region34: #{tpu_custom_call.1} parent=19 // pred_check_branch
          %417 = sbr.rel (%p415) target = $region36
        $region35: #{tpu_custom_call.1} parent=19 // pred_region
          %p418 = scmp.lt.s32.totalorder %s29, 1
          %s419 = scalar_select %p418, %s29, 1
          %s420 = smul.addr %s419, 8
          %s421 = scalar_lea.vmem %s3, %s420
        $region36: #{tpu_custom_call.1} parent=19 // pred_fallthru
          _
        // Predicated region
        $region37: #{tpu_custom_call.1} parent=19 // pred_check
          %p422 = pneg %p153
        $region38: #{tpu_custom_call.1} parent=19 // pred_check_branch
          %424 = sbr.rel (%p422) target = $region40
        $region39: #{tpu_custom_call.1} parent=19 // pred_region
          %p425 = scmp.lt.s32.totalorder %s29, 1
          %s426 = scalar_select %p425, %s29, 1
          %s427 = scalar_lea.vmem %s4, %s426
        $region40: #{tpu_custom_call.1} parent=19 // pred_fallthru
          _
        // Predicated region
        $region41: #{tpu_custom_call.1} parent=19 // pred_check
          %p428 = pneg %p179
        $region42: #{tpu_custom_call.1} parent=19 // pred_check_branch
          %430 = sbr.rel (%p428) target = $region44
        $region43: #{tpu_custom_call.1} parent=19 // pred_region
          %p431 = scmp.lt.s32.totalorder %s29, 1
          %s432 = scalar_select %p431, %s29, 1
          %s433 = smul.addr %s432, 4
          %s434 = scalar_lea.vmem %s5, %s433
        $region44: #{tpu_custom_call.1} parent=19 // pred_fallthru
          _
        // Predicated region
        $region45: #{tpu_custom_call.1} parent=19 // pred_check
          %p435 = pneg %p205
        $region46: #{tpu_custom_call.1} parent=19 // pred_check_branch
          %437 = sbr.rel (%p435) target = $region48
        $region47: #{tpu_custom_call.1} parent=19 // pred_region
          %p438 = scmp.lt.s32.totalorder %s29, 1
          %s439 = scalar_select %p438, %s29, 1
          %s440 = smul.addr %s439, 8
          %s441 = scalar_lea.vmem %s6, %s440
        $region48: #{tpu_custom_call.1} parent=19 // pred_fallthru
          _
        // Predicated region
        $region49: #{tpu_custom_call.1} parent=19 // pred_check
          %p442 = pneg %p231
        $region50: #{tpu_custom_call.1} parent=19 // pred_check_branch
          %444 = sbr.rel (%p442) target = $region52
        $region51: #{tpu_custom_call.1} parent=19 // pred_region
          %p445 = scmp.lt.s32.totalorder %s29, 1
          %s446 = scalar_select %p445, %s29, 1
          %s447 = smul.addr %s446, 4
          %s448 = scalar_lea.vmem %s7, %s447
        $region52: #{tpu_custom_call.1} parent=19 // pred_fallthru
          _
      $region20: #{tpu_custom_call.1} parent=5 // pred_fallthru
        _
      %p449 = scmp.le.s32.totalorder 1, %s29
      %p450 = scmp.lt.s32.totalorder %s29, 3
      %p451 = pnand %p449, %p450
      %p452 = pneg %p451
      // Predicated region
      $region53: #{tpu_custom_call.1} parent=5 // pred_check
        _
      $region54: #{tpu_custom_call.1} parent=5 // pred_check_branch
        %454 = sbr.rel (%p451) target = $region56
      $region55: #{tpu_custom_call.1} parent=5 // pred_region
        %s455 = ssub.s32 %s29, 1
        // Predicated region
        $region57: #{tpu_custom_call.1} parent=55 // pred_check
          %p456 = pneg %p258
        $region58: #{tpu_custom_call.1} parent=55 // pred_check_branch
          %458 = sbr.rel (%p456) target = $region60
        $region59: #{tpu_custom_call.1} parent=55 // pred_region
          %460 = dma.done [#allocation3], 3072
        $region60: #{tpu_custom_call.1} parent=55 // pred_fallthru
          _
        %p461 = scmp.lt.s32.totalorder %s34, 1
        %s462 = scalar_select %p461, %s34, 1
        %s463 = smul.addr %s462, 8
        %s464 = scalar_lea.vmem %s0, %s463
        %p465 = pneg %p55
        %p466 = pneg %p52
        %p467 = scmp.lt.s32.totalorder %s34, 1
        %s468 = scalar_select %p467, %s34, 1
        %s469 = smul.addr %s468, 4
        %s470 = scalar_lea.vmem %s1, %s469
        %p471 = pneg %p81
        %p472 = pneg %p78
        %p473 = scmp.lt.s32.totalorder %s34, 1
        %s474 = scalar_select %p473, %s34, 1
        %s475 = scalar_lea.vmem %s2, %s474
        %p476 = pneg %p107
        %p477 = pneg %p104
        %p478 = scmp.lt.s32.totalorder %s34, 1
        %s479 = scalar_select %p478, %s34, 1
        %s480 = smul.addr %s479, 8
        %s481 = scalar_lea.vmem %s3, %s480
        %p482 = pneg %p133
        %p483 = pneg %p130
        %p484 = scmp.lt.s32.totalorder %s34, 1
        %s485 = scalar_select %p484, %s34, 1
        %s486 = scalar_lea.vmem %s4, %s485
        %p487 = pneg %p159
        %p488 = pneg %p156
        %p489 = scmp.lt.s32.totalorder %s34, 1
        %s490 = scalar_select %p489, %s34, 1
        %s491 = smul.addr %s490, 4
        %s492 = scalar_lea.vmem %s5, %s491
        %p493 = pneg %p185
        %p494 = pneg %p182
        %p495 = scmp.lt.s32.totalorder %s34, 1
        %s496 = scalar_select %p495, %s34, 1
        %s497 = smul.addr %s496, 8
        %s498 = scalar_lea.vmem %s6, %s497
        %p499 = pneg %p211
        %p500 = pneg %p208
        %p501 = scmp.lt.s32.totalorder %s34, 1
        %s502 = scalar_select %p501, %s34, 1
        %s503 = smul.addr %s502, 4
        %s504 = scalar_lea.vmem %s7, %s503
        %p505 = pneg %p237
        %p506 = pneg %p234
        %p507 = pneg %p258
        %p508 = pneg %p255
        %p509 = pneg %p284
        %p510 = pneg %p281
        %s511 = sand.u32 %s271, 1
        %s512 = scalar_lea.sflag [#allocation4], %s511
        %s513 = sand.u32 %s271, 1
        %s514 = smul.addr %s513, 8
        %s515 = scalar_lea.vmem [#allocation5], %s514
        %p516 = pneg %p310
        %p517 = pneg %p307
        %s518 = sand.u32 %s34, 1
        %s519 = scalar_lea.sflag [#allocation7], %s518
        %s520 = sand.u32 %s297, 1
        %s521 = smul.addr %s520, 4
        %s522 = scalar_lea.vmem [#allocation6], %s521
        %p523 = pneg %p336
        %p524 = pneg %p333
        %s525 = sand.u32 %s34, 1
        %s526 = scalar_lea.sflag [#allocation7], %s525
        %s527 = sand.u32 %s323, 1
        %s528 = smul.addr %s527, 8
        %s529 = scalar_lea.vmem [#allocation8], %s528
        %p530 = pneg %p362
        %p531 = pneg %p359
        %s532 = sand.u32 %s349, 1
        %s533 = scalar_lea.sflag [#allocation10], %s532
        %s534 = sand.u32 %s349, 1
        %s535 = smul.addr %s534, 4
        %s536 = scalar_lea.vmem [#allocation9], %s535
        %p537 = scmp.lt.s32.totalorder %s34, 1
        %s538 = scalar_select %p537, %s34, 1
        %s539 = smul.addr %s538, 8
        %s540 = scalar_lea.vmem %s0, %s539
        %p541 = scmp.lt.s32.totalorder %s34, 1
        %s542 = scalar_select %p541, %s34, 1
        %s543 = smul.addr %s542, 4
        %s544 = scalar_lea.vmem %s1, %s543
        %p545 = scmp.lt.s32.totalorder %s34, 1
        %s546 = scalar_select %p545, %s34, 1
        %s547 = scalar_lea.vmem %s2, %s546
        %p548 = scmp.lt.s32.totalorder %s34, 1
        %s549 = scalar_select %p548, %s34, 1
        %s550 = smul.addr %s549, 8
        %s551 = scalar_lea.vmem %s3, %s550
        %p552 = scmp.lt.s32.totalorder %s34, 1
        %s553 = scalar_select %p552, %s34, 1
        %s554 = scalar_lea.vmem %s4, %s553
        %p555 = scmp.lt.s32.totalorder %s34, 1
        %s556 = scalar_select %p555, %s34, 1
        %s557 = smul.addr %s556, 4
        %s558 = scalar_lea.vmem %s5, %s557
        %p559 = scmp.lt.s32.totalorder %s34, 1
        %s560 = scalar_select %p559, %s34, 1
        %s561 = smul.addr %s560, 8
        %s562 = scalar_lea.vmem %s6, %s561
        %p563 = scmp.lt.s32.totalorder %s34, 1
        %s564 = scalar_select %p563, %s34, 1
        %s565 = smul.addr %s564, 4
        %s566 = scalar_lea.vmem %s7, %s565
        %v567 = vld [vmem:[%s540] sm:$0xff]
        %v568 = vld [vmem:[%s544] sm:$0xf]
        %v569 = vld [vmem:[%s547] sm:$0x1]
        %v570 = vld [vmem:[%s551] sm:$0xff]
        %v571 = vld [vmem:[%s554] sm:$0x1]
        %v572 = vld [vmem:[%s558] sm:$0xf]
        %v573 = vld [vmem:[#allocation2] sm:$0xff]
        %v574 = vld [vmem:[#allocation2 + $0x8] sm:$0xff]
        %v575 = vld [vmem:[#allocation2 + $0x10] sm:$0xff]
        %v576 = vld [vmem:[#allocation2 + $0x18] sm:$0xff]
        %s577 = scalar_lea.vmem [#allocation2], 32
        %v578 = vld [vmem:[%s577] sm:$0xff]
        %v579 = vld [vmem:[%s577 + $0x8] sm:$0xff]
        %v580 = vld [vmem:[%s577 + $0x10] sm:$0xff]
        %v581 = vld [vmem:[%s577 + $0x18] sm:$0xff]
        %s582 = scalar_lea.vmem [#allocation2], 64
        %v583 = vld [vmem:[%s582] sm:$0xff]
        %v584 = vld [vmem:[%s582 + $0x8] sm:$0xff]
        %v585 = vld [vmem:[%s582 + $0x10] sm:$0xff]
        %v586 = vld [vmem:[%s582 + $0x18] sm:$0xff]
        %s587 = scalar_lea.vmem [#allocation2], 96
        %v588 = vld [vmem:[%s587] sm:$0xff]
        %v589 = vld [vmem:[%s587 + $0x8] sm:$0xff]
        %v590 = vld [vmem:[%s587 + $0x10] sm:$0xff]
        %v591 = vld [vmem:[%s587 + $0x18] sm:$0xff]
        %s592 = scalar_lea.vmem [#allocation2], 128
        %v593 = vld [vmem:[%s592] sm:$0xff]
        %v594 = vld [vmem:[%s592 + $0x8] sm:$0xff]
        %v595 = vld [vmem:[%s592 + $0x10] sm:$0xff]
        %v596 = vld [vmem:[%s592 + $0x18] sm:$0xff]
        %s597 = scalar_lea.vmem [#allocation2], 160
        %v598 = vld [vmem:[%s597] sm:$0xff]
        %v599 = vld [vmem:[%s597 + $0x8] sm:$0xff]
        %v600 = vld [vmem:[%s597 + $0x10] sm:$0xff]
        %v601 = vld [vmem:[%s597 + $0x18] sm:$0xff]
        %vm602 = vcmask 261120
        %v604 = vsel %vm602, %v567, 0
        %606 = vmatpush.msra.mxu0 0.0
        %607 = vmatpush.msra.mxu0 0.0
        %608 = vmatpush.msra.mxu0 0.0
        %609 = vmatpush.msra.mxu0 0.0
        %610 = vmatpush.msra.mxu0 0.0
        %611 = vmatpush.msra.mxu0 0.0
        %612 = vmatpush.msra.mxu0 0.0
        %613 = vmatpush.msra.mxu0 0.0
        %614 = vmatpush.msra.mxu0 0.0
        %615 = vmatpush.msra.mxu0 0.0
        %616 = vmatpush.msra.mxu0 0.0
        %617 = vmatpush.msra.mxu0 0.0
        %618 = vmatpush.msra.mxu0 %v576
        %619 = vmatpush.msra.mxu0 %v575
        %620 = vmatpush.msra.mxu0 %v574
        %621 = vmatpush.msra.mxu0 %v573
        %622 = vmatmul.f32.gmra.mxu0 %v604
        %v623 = vpop.f32.mrf.mxu0
        %v624 = vadd.f32 0.0, %v623
        %625 = vdwg.mxu0
        %v627 = vsel %vm602, %v568, 0
        %629 = vmatpush.msra.mxu0 0.0
        %630 = vmatpush.msra.mxu0 0.0
        %631 = vmatpush.msra.mxu0 0.0
        %632 = vmatpush.msra.mxu0 0.0
        %633 = vmatpush.msra.mxu0 0.0
        %634 = vmatpush.msra.mxu0 0.0
        %635 = vmatpush.msra.mxu0 0.0
        %636 = vmatpush.msra.mxu0 0.0
        %637 = vmatpush.msra.mxu0 0.0
        %638 = vmatpush.msra.mxu0 0.0
        %639 = vmatpush.msra.mxu0 0.0
        %640 = vmatpush.msra.mxu0 0.0
        %641 = vmatpush.msra.mxu0 %v581
        %642 = vmatpush.msra.mxu0 %v580
        %643 = vmatpush.msra.mxu0 %v579
        %644 = vmatpush.msra.mxu0 %v578
        %645 = vmatmul.f32.gmra.mxu0 %v627
        %v646 = vpop.f32.mrf.mxu0
        %v647 = vadd.f32 0.0, %v646
        %648 = vdwg.mxu0
        %649 = vmatpush.msra.mxu0 0.0
        %650 = vmatpush.msra.mxu0 0.0
        %651 = vmatpush.msra.mxu0 0.0
        %652 = vmatpush.msra.mxu0 0.0
        %653 = vmatpush.msra.mxu0 0.0
        %654 = vmatpush.msra.mxu0 0.0
        %655 = vmatpush.msra.mxu0 0.0
        %656 = vmatpush.msra.mxu0 0.0
        %657 = vmatpush.msra.mxu0 0.0
        %658 = vmatpush.msra.mxu0 0.0
        %659 = vmatpush.msra.mxu0 0.0
        %660 = vmatpush.msra.mxu0 0.0
        %661 = vmatpush.msra.mxu0 %v586
        %662 = vmatpush.msra.mxu0 %v585
        %663 = vmatpush.msra.mxu0 %v584
        %664 = vmatpush.msra.mxu0 %v583
        %665 = vmatmul.f32.gmra.mxu0 %v604
        %v666 = vpop.f32.mrf.mxu0
        %v667 = vadd.f32 0.0, %v666
        %668 = vdwg.mxu0
        %669 = vmatpush.msra.mxu0 0.0
        %670 = vmatpush.msra.mxu0 0.0
        %671 = vmatpush.msra.mxu0 0.0
        %672 = vmatpush.msra.mxu0 0.0
        %673 = vmatpush.msra.mxu0 0.0
        %674 = vmatpush.msra.mxu0 0.0
        %675 = vmatpush.msra.mxu0 0.0
        %676 = vmatpush.msra.mxu0 0.0
        %677 = vmatpush.msra.mxu0 0.0
        %678 = vmatpush.msra.mxu0 0.0
        %679 = vmatpush.msra.mxu0 0.0
        %680 = vmatpush.msra.mxu0 0.0
        %681 = vmatpush.msra.mxu0 %v591
        %682 = vmatpush.msra.mxu0 %v590
        %683 = vmatpush.msra.mxu0 %v589
        %684 = vmatpush.msra.mxu0 %v588
        %685 = vmatmul.f32.gmra.mxu0 %v627
        %v686 = vpop.f32.mrf.mxu0
        %v687 = vadd.f32 0.0, %v686
        %688 = vdwg.mxu0
        %v690 = vsel %vm602, %v624, 0
        %v693 = vsel %vm602, %v647, 0
        %695 = vmatpush.xpose.msra.mxu0 0.0
        %696 = vmatpush.xpose.msra.mxu0 0.0
        %697 = vmatpush.xpose.msra.mxu0 0.0
        %698 = vmatpush.xpose.msra.mxu0 0.0
        %699 = vmatpush.xpose.msra.mxu0 0.0
        %700 = vmatpush.xpose.msra.mxu0 0.0
        %701 = vmatpush.xpose.msra.mxu0 0.0
        %702 = vmatpush.xpose.msra.mxu0 0.0
        %703 = vmatpush.xpose.msra.mxu0 0.0
        %704 = vmatpush.xpose.msra.mxu0 0.0
        %705 = vmatpush.xpose.msra.mxu0 0.0
        %706 = vmatpush.xpose.msra.mxu0 0.0
        %707 = vmatpush.xpose.msra.mxu0 0.0
        %708 = vmatpush.xpose.msra.mxu0 0.0
        %709 = vmatpush.xpose.msra.mxu0 0.0
        %710 = vmatpush.xpose.msra.mxu0 %v693
        %711 = vmatmul.f32.gmra.mxu0 %v690
        %v712 = vpop.f32.mrf.mxu0
        %v713 = vadd.f32 0.0, %v712
        %714 = vdwg.mxu0
        %715 = vmatpush.xpose.msra.mxu0 0.0
        %716 = vmatpush.xpose.msra.mxu0 0.0
        %717 = vmatpush.xpose.msra.mxu0 0.0
        %718 = vmatpush.xpose.msra.mxu0 0.0
        %719 = vmatpush.xpose.msra.mxu0 0.0
        %720 = vmatpush.xpose.msra.mxu0 0.0
        %721 = vmatpush.xpose.msra.mxu0 0.0
        %722 = vmatpush.xpose.msra.mxu0 0.0
        %723 = vmatpush.xpose.msra.mxu0 0.0
        %724 = vmatpush.xpose.msra.mxu0 0.0
        %725 = vmatpush.xpose.msra.mxu0 0.0
        %726 = vmatpush.xpose.msra.mxu0 0.0
        %727 = vmatpush.xpose.msra.mxu0 0.0
        %728 = vmatpush.xpose.msra.mxu0 0.0
        %729 = vmatpush.xpose.msra.mxu0 0.0
        %730 = vmatpush.xpose.msra.mxu0 %v690
        %731 = vmatmul.f32.gmra.mxu0 %v693
        %v732 = vpop.f32.mrf.mxu0
        %v733 = vadd.f32 0.0, %v732
        %734 = vdwg.mxu0
        %vm735 = vcmp.gt.f32.partialorder %v571, 0.5
        %v736 = vmul.f32 %v713, 0.17677669
        %v737 = vsel %vm735, 1, 0
        %v738 = vperm.slane %v737, 0
        %vm739 = vcmp.eq.s32.totalorder %v738, 1
        %v740 = vsel %vm739, -inf, %v736
        %vm741 = vcmask 31744
        %v742 = vsel %vm741, %v740, -inf
        %743 = vmax.xlane.f32.xlu0 %v742
        %v744 = vpop.xlane.xlu0 %743
        %v745 = vsub.f32 %v740, %v744
        %v746 = vmul.f32 %v745, 1.442695
        %v747 = vpow.pop %v746
        %v748 = vsel %vm741, %v747, 0.0
        %749 = vadd.xlane.f32.xlu0 %v748
        %v750 = vpop.xlane.xlu0 %749
        %v751 = vrcp.pop %v750
        %v752 = vmul.f32 %v750, %v751
        %v753 = vsub.f32 1.0, %v752
        %v754 = vmul.f32 %v751, %v753
        %v755 = vadd.f32 %v751, %v754
        %vm756 = vweird.f32 %v750
        %vm757 = vweird.f32 %v751
        %vm758 = vmor %vm756, %vm757
        %v759 = vsel %vm758, %v751, %v755
        %v760 = vand.u32 2147483647, %v750
        %vm761 = vcmp.eq.f32.partialorder %v760, 8.507059e+37
        %v762 = vand.u32 %v750, 2147483648
        %v763 = vor.u32 1.1754944e-38, %v762
        %v764 = vsel %vm761, %v763, %v759
        %v765 = vmul.f32 %v747, %v764
        %vm766 = vcmp.gt.f32.partialorder %v570, 0.5
        %v767 = vsel %vm766, 1, 0
        %768 = vset.pattern.permute.xlu0 0
        %769 = vperm.xlu0 %768, %v767
        %v770 = vpop.permute.xlu0 %769
        %vm771 = vcmp.eq.s32.totalorder %v770, 1
        %v772 = vsel %vm771, 0.0, %v765
        %v774 = vsel %vm741, %v772, 0
        %vm776 = vcmask 1043456
        %v778 = vsel %vm776, %v687, 0
        %780 = vmatpush.msra.mxu0 0.0
        %781 = vmatpush.msra.mxu0 0.0
        %782 = vmatpush.msra.mxu0 0.0
        %783 = vmatpush.msra.mxu0 0.0
        %784 = vmatpush.msra.mxu0 0.0
        %785 = vmatpush.msra.mxu0 0.0
        %786 = vmatpush.msra.mxu0 0.0
        %787 = vmatpush.msra.mxu0 0.0
        %788 = vmatpush.msra.mxu0 0.0
        %789 = vmatpush.msra.mxu0 0.0
        %790 = vmatpush.msra.mxu0 0.0
        %791 = vmatpush.msra.mxu0 0.0
        %792 = vmatpush.msra.mxu0 0.0
        %793 = vmatpush.msra.mxu0 0.0
        %794 = vmatpush.msra.mxu0 0.0
        %795 = vmatpush.msra.mxu0 %v778
        %796 = vmatmul.f32.gmra.mxu0 %v774
        %v797 = vpop.f32.mrf.mxu0
        %v798 = vadd.f32 0.0, %v797
        %799 = vdwg.mxu0
        %v801 = vsel %vm602, %v798, 0
        %803 = vmatpush.msra.mxu0 0.0
        %804 = vmatpush.msra.mxu0 0.0
        %805 = vmatpush.msra.mxu0 0.0
        %806 = vmatpush.msra.mxu0 0.0
        %807 = vmatpush.msra.mxu0 0.0
        %808 = vmatpush.msra.mxu0 0.0
        %809 = vmatpush.msra.mxu0 0.0
        %810 = vmatpush.msra.mxu0 0.0
        %811 = vmatpush.msra.mxu0 0.0
        %812 = vmatpush.msra.mxu0 0.0
        %813 = vmatpush.msra.mxu0 0.0
        %814 = vmatpush.msra.mxu0 0.0
        %815 = vmatpush.msra.mxu0 %v596
        %816 = vmatpush.msra.mxu0 %v595
        %817 = vmatpush.msra.mxu0 %v594
        %818 = vmatpush.msra.mxu0 %v593
        %819 = vmatmul.f32.gmra.mxu0 %v801
        %v820 = vpop.f32.mrf.mxu0
        %v821 = vadd.f32 0.0, %v820
        %822 = vdwg.mxu0
        %vm823 = vcmp.gt.f32.partialorder %v569, 0.5
        %v824 = vmul.f32 %v733, 0.17677669
        %v825 = vsel %vm823, 1, 0
        %v826 = vperm.slane %v825, 0
        %vm827 = vcmp.eq.s32.totalorder %v826, 1
        %v828 = vsel %vm827, -inf, %v824
        %vm829 = vcmask 60416
        %v830 = vsel %vm829, %v828, -inf
        %831 = vmax.xlane.f32.xlu0 %v830
        %v832 = vpop.xlane.xlu0 %831
        %v833 = vsub.f32 %v828, %v832
        %v834 = vmul.f32 %v833, 1.442695
        %v835 = vpow.pop %v834
        %v836 = vsel %vm829, %v835, 0.0
        %837 = vadd.xlane.f32.xlu0 %v836
        %v838 = vpop.xlane.xlu0 %837
        %v839 = vrcp.pop %v838
        %v840 = vmul.f32 %v838, %v839
        %v841 = vsub.f32 1.0, %v840
        %v842 = vmul.f32 %v839, %v841
        %v843 = vadd.f32 %v839, %v842
        %vm844 = vweird.f32 %v838
        %vm845 = vweird.f32 %v839
        %vm846 = vmor %vm844, %vm845
        %v847 = vsel %vm846, %v839, %v843
        %v848 = vand.u32 2147483647, %v838
        %vm849 = vcmp.eq.f32.partialorder %v848, 8.507059e+37
        %v850 = vand.u32 %v838, 2147483648
        %v851 = vor.u32 1.1754944e-38, %v850
        %v852 = vsel %vm849, %v851, %v847
        %v853 = vmul.f32 %v835, %v852
        %vm854 = vcmp.gt.f32.partialorder %v572, 0.5
        %v855 = vsel %vm854, 1, 0
        %856 = vset.pattern.permute.xlu0 0
        %857 = vperm.xlu0 %856, %v855
        %v858 = vpop.permute.xlu0 %857
        %vm859 = vcmp.eq.s32.totalorder %v858, 1
        %v860 = vsel %vm859, 0.0, %v853
        %vm861 = vcmask 64512
        %v863 = vsel %vm861, %v860, 0
        %865 = vmatpush.msra.mxu0 0.0
        %866 = vmatpush.msra.mxu0 0.0
        %867 = vmatpush.msra.mxu0 0.0
        %868 = vmatpush.msra.mxu0 0.0
        %869 = vmatpush.msra.mxu0 0.0
        %870 = vmatpush.msra.mxu0 0.0
        %871 = vmatpush.msra.mxu0 0.0
        %872 = vmatpush.msra.mxu0 0.0
        %873 = vmatpush.msra.mxu0 0.0
        %874 = vmatpush.msra.mxu0 0.0
        %875 = vmatpush.msra.mxu0 0.0
        %876 = vmatpush.msra.mxu0 0.0
        %877 = vmatpush.msra.mxu0 0.0
        %878 = vmatpush.msra.mxu0 0.0
        %879 = vmatpush.msra.mxu0 0.0
        %880 = vmatpush.msra.mxu0 %v667
        %881 = vmatmul.f32.gmra.mxu0 %v863
        %v882 = vpop.f32.mrf.mxu0
        %v883 = vadd.f32 0.0, %v882
        %884 = vdwg.mxu0
        %v886 = vsel %vm602, %v883, 0
        %888 = vmatpush.msra.mxu0 0.0
        %889 = vmatpush.msra.mxu0 0.0
        %890 = vmatpush.msra.mxu0 0.0
        %891 = vmatpush.msra.mxu0 0.0
        %892 = vmatpush.msra.mxu0 0.0
        %893 = vmatpush.msra.mxu0 0.0
        %894 = vmatpush.msra.mxu0 0.0
        %895 = vmatpush.msra.mxu0 0.0
        %896 = vmatpush.msra.mxu0 0.0
        %897 = vmatpush.msra.mxu0 0.0
        %898 = vmatpush.msra.mxu0 0.0
        %899 = vmatpush.msra.mxu0 0.0
        %900 = vmatpush.msra.mxu0 %v601
        %901 = vmatpush.msra.mxu0 %v600
        %902 = vmatpush.msra.mxu0 %v599
        %903 = vmatpush.msra.mxu0 %v598
        %904 = vmatmul.f32.gmra.mxu0 %v886
        %v905 = vpop.f32.mrf.mxu0
        %v906 = vadd.f32 0.0, %v905
        %907 = vdwg.mxu0
        %v908 = vld [vmem:[%s562] sm:$0xff]
        %v909 = vmul.f32 %v908, 0.17677669
        %v910 = vsel %vm739, -inf, %v909
        %v911 = vsel %vm741, %v910, -inf
        %912 = vmax.xlane.f32.xlu0 %v911
        %v913 = vpop.xlane.xlu0 %912
        %v914 = vsub.f32 %v910, %v913
        %v915 = vmul.f32 %v914, 1.442695
        %v916 = vpow.pop %v915
        %v917 = vsel %vm741, %v916, 0.0
        %918 = vadd.xlane.f32.xlu0 %v917
        %v919 = vpop.xlane.xlu0 %918
        %v920 = vrcp.pop %v919
        %v921 = vmul.f32 %v919, %v920
        %v922 = vsub.f32 1.0, %v921
        %v923 = vmul.f32 %v920, %v922
        %v924 = vadd.f32 %v920, %v923
        %vm925 = vweird.f32 %v919
        %vm926 = vweird.f32 %v920
        %vm927 = vmor %vm925, %vm926
        %v928 = vsel %vm927, %v920, %v924
        %v929 = vand.u32 2147483647, %v919
        %vm930 = vcmp.eq.f32.partialorder %v929, 8.507059e+37
        %v931 = vand.u32 %v919, 2147483648
        %v932 = vor.u32 1.1754944e-38, %v931
        %v933 = vsel %vm930, %v932, %v928
        %v934 = vmul.f32 %v916, %v933
        %v935 = vsel %vm771, 0.0, %v934
        %v937 = vsel %vm741, %v935, 0
        %939 = vmatpush.msra.mxu0 0.0
        %940 = vmatpush.msra.mxu0 0.0
        %941 = vmatpush.msra.mxu0 0.0
        %942 = vmatpush.msra.mxu0 0.0
        %943 = vmatpush.msra.mxu0 0.0
        %944 = vmatpush.msra.mxu0 0.0
        %945 = vmatpush.msra.mxu0 0.0
        %946 = vmatpush.msra.mxu0 0.0
        %947 = vmatpush.msra.mxu0 0.0
        %948 = vmatpush.msra.mxu0 0.0
        %949 = vmatpush.msra.mxu0 0.0
        %950 = vmatpush.msra.mxu0 0.0
        %951 = vmatpush.msra.mxu0 0.0
        %952 = vmatpush.msra.mxu0 0.0
        %953 = vmatpush.msra.mxu0 0.0
        %954 = vmatpush.msra.mxu0 %v778
        %955 = vmatmul.f32.gmra.mxu0 %v937
        %v956 = vpop.f32.mrf.mxu0
        %v957 = vadd.f32 0.0, %v956
        %958 = vdwg.mxu0
        %v960 = vsel %vm602, %v957, 0
        %962 = vmatpush.msra.mxu0 0.0
        %963 = vmatpush.msra.mxu0 0.0
        %964 = vmatpush.msra.mxu0 0.0
        %965 = vmatpush.msra.mxu0 0.0
        %966 = vmatpush.msra.mxu0 0.0
        %967 = vmatpush.msra.mxu0 0.0
        %968 = vmatpush.msra.mxu0 0.0
        %969 = vmatpush.msra.mxu0 0.0
        %970 = vmatpush.msra.mxu0 0.0
        %971 = vmatpush.msra.mxu0 0.0
        %972 = vmatpush.msra.mxu0 0.0
        %973 = vmatpush.msra.mxu0 0.0
        %974 = vmatpush.msra.mxu0 %v596
        %975 = vmatpush.msra.mxu0 %v595
        %976 = vmatpush.msra.mxu0 %v594
        %977 = vmatpush.msra.mxu0 %v593
        %978 = vmatmul.f32.gmra.mxu0 %v960
        %v979 = vpop.f32.mrf.mxu0
        %v980 = vadd.f32 0.0, %v979
        %981 = vdwg.mxu0
        %v982 = vld [vmem:[%s566] sm:$0xf]
        %v983 = vmul.f32 %v982, 0.17677669
        %v984 = vsel %vm827, -inf, %v983
        %v985 = vsel %vm829, %v984, -inf
        %986 = vmax.xlane.f32.xlu0 %v985
        %v987 = vpop.xlane.xlu0 %986
        %v988 = vsub.f32 %v984, %v987
        %v989 = vmul.f32 %v988, 1.442695
        %v990 = vpow.pop %v989
        %v991 = vsel %vm829, %v990, 0.0
        %992 = vadd.xlane.f32.xlu0 %v991
        %v993 = vpop.xlane.xlu0 %992
        %v994 = vrcp.pop %v993
        %v995 = vmul.f32 %v993, %v994
        %v996 = vsub.f32 1.0, %v995
        %v997 = vmul.f32 %v994, %v996
        %v998 = vadd.f32 %v994, %v997
        %vm999 = vweird.f32 %v993
        %vm1000 = vweird.f32 %v994
        %vm1001 = vmor %vm999, %vm1000
        %v1002 = vsel %vm1001, %v994, %v998
        %v1003 = vand.u32 2147483647, %v993
        %vm1004 = vcmp.eq.f32.partialorder %v1003, 8.507059e+37
        %v1005 = vand.u32 %v993, 2147483648
        %v1006 = vor.u32 1.1754944e-38, %v1005
        %v1007 = vsel %vm1004, %v1006, %v1002
        %v1008 = vmul.f32 %v990, %v1007
        %v1009 = vsel %vm859, 0.0, %v1008
        %v1011 = vsel %vm861, %v1009, 0
        %1013 = vmatpush.msra.mxu0 0.0
        %1014 = vmatpush.msra.mxu0 0.0
        %1015 = vmatpush.msra.mxu0 0.0
        %1016 = vmatpush.msra.mxu0 0.0
        %1017 = vmatpush.msra.mxu0 0.0
        %1018 = vmatpush.msra.mxu0 0.0
        %1019 = vmatpush.msra.mxu0 0.0
        %1020 = vmatpush.msra.mxu0 0.0
        %1021 = vmatpush.msra.mxu0 0.0
        %1022 = vmatpush.msra.mxu0 0.0
        %1023 = vmatpush.msra.mxu0 0.0
        %1024 = vmatpush.msra.mxu0 0.0
        %1025 = vmatpush.msra.mxu0 0.0
        %1026 = vmatpush.msra.mxu0 0.0
        %1027 = vmatpush.msra.mxu0 0.0
        %1028 = vmatpush.msra.mxu0 %v667
        %1029 = vmatmul.f32.gmra.mxu0 %v1011
        %v1030 = vpop.f32.mrf.mxu0
        %v1031 = vadd.f32 0.0, %v1030
        %1032 = vdwg.mxu0
        %v1034 = vsel %vm602, %v1031, 0
        %1036 = vmatpush.msra.mxu0 0.0
        %1037 = vmatpush.msra.mxu0 0.0
        %1038 = vmatpush.msra.mxu0 0.0
        %1039 = vmatpush.msra.mxu0 0.0
        %1040 = vmatpush.msra.mxu0 0.0
        %1041 = vmatpush.msra.mxu0 0.0
        %1042 = vmatpush.msra.mxu0 0.0
        %1043 = vmatpush.msra.mxu0 0.0
        %1044 = vmatpush.msra.mxu0 0.0
        %1045 = vmatpush.msra.mxu0 0.0
        %1046 = vmatpush.msra.mxu0 0.0
        %1047 = vmatpush.msra.mxu0 0.0
        %1048 = vmatpush.msra.mxu0 %v601
        %1049 = vmatpush.msra.mxu0 %v600
        %1050 = vmatpush.msra.mxu0 %v599
        %1051 = vmatpush.msra.mxu0 %v598
        %1052 = vmatmul.f32.gmra.mxu0 %v1034
        %v1053 = vpop.f32.mrf.mxu0
        %v1054 = vadd.f32 0.0, %v1053
        %1055 = vdwg.mxu0
        %v1056 = vadd.f32 %v821, %v567
        %v1057 = vsel %vm602, %v1056, 0.0
        %1058 = vadd.xlane.f32.xlu0 %v1057
        %v1059 = vpop.xlane.xlu0 %1058
        %v1060 = vrcp.pop 32.0
        %v1061 = vmul.f32 32.0, %v1060
        %v1062 = vsub.f32 1.0, %v1061
        %v1063 = vmul.f32 %v1060, %v1062
        %v1064 = vadd.f32 %v1060, %v1063
        %vm1065 = vweird.f32 %v1060
        %v1066 = vsel %vm1065, %v1060, %v1064
        %v1067 = vmul.f32 %v1059, %v1066
        %v1068 = vsub.f32 %v1056, %v1067
        %v1069 = vmul.f32 %v1068, %v1068
        %v1070 = vsel %vm602, %v1069, 0.0
        %1071 = vadd.xlane.f32.xlu0 %v1070
        %v1072 = vpop.xlane.xlu0 %1071
        %v1073 = vmul.f32 %v1072, %v1066
        %v1074 = vadd.f32 %v1073, 1e-05
        %v1075 = vrsqrt.pop %v1074
        %v1076 = vmul.f32 %v1075, %v1074
        %v1077 = vmul.f32 %v1076, %v1075
        %v1078 = vmul.f32 0.5, %v1077
        %v1079 = vsub.f32 1.5, %v1078
        %v1080 = vmul.f32 %v1075, %v1079
        %vm1081 = vweird.f32 %v1074
        %vm1082 = vweird.f32 %v1075
        %vm1083 = vmor %vm1081, %vm1082
        %v1084 = vsel %vm1083, %v1075, %v1080
        %v1085 = vmul.f32 %v1068, %v1084
        %1086 = vst.msk [vmem:[%s515] sm:$0xff] %vm602, %v1085
        %v1087 = vadd.f32 %v906, %v568
        %vm1088 = vcmask 257024
        %v1089 = vsel %vm1088, %v1087, 0.0
        %1090 = vadd.xlane.f32.xlu0 %v1089
        %v1091 = vpop.xlane.xlu0 %1090
        %v1092 = vmul.f32 %v1091, %v1066
        %v1093 = vsub.f32 %v1087, %v1092
        %v1094 = vmul.f32 %v1093, %v1093
        %v1095 = vsel %vm1088, %v1094, 0.0
        %1096 = vadd.xlane.f32.xlu0 %v1095
        %v1097 = vpop.xlane.xlu0 %1096
        %v1098 = vmul.f32 %v1097, %v1066
        %v1099 = vadd.f32 %v1098, 1e-05
        %v1100 = vrsqrt.pop %v1099
        %v1101 = vmul.f32 %v1100, %v1099
        %v1102 = vmul.f32 %v1101, %v1100
        %v1103 = vmul.f32 0.5, %v1102
        %v1104 = vsub.f32 1.5, %v1103
        %v1105 = vmul.f32 %v1100, %v1104
        %vm1106 = vweird.f32 %v1099
        %vm1107 = vweird.f32 %v1100
        %vm1108 = vmor %vm1106, %vm1107
        %v1109 = vsel %vm1108, %v1100, %v1105
        %v1110 = vmul.f32 %v1093, %v1109
        %1111 = vst.msk [vmem:[%s522] sm:$0xf] %vm1088, %v1110
        %v1112 = vsub.f32 %v821, %v980
        %v1113 = vadd.f32 %v1112, %v567
        %v1114 = vsel %vm602, %v1113, 0.0
        %1115 = vadd.xlane.f32.xlu0 %v1114
        %v1116 = vpop.xlane.xlu0 %1115
        %v1117 = vmul.f32 %v1116, %v1066
        %v1118 = vsub.f32 %v1113, %v1117
        %v1119 = vmul.f32 %v1118, %v1118
        %v1120 = vsel %vm602, %v1119, 0.0
        %1121 = vadd.xlane.f32.xlu0 %v1120
        %v1122 = vpop.xlane.xlu0 %1121
        %v1123 = vmul.f32 %v1122, %v1066
        %v1124 = vadd.f32 %v1123, 1e-05
        %v1125 = vrsqrt.pop %v1124
        %v1126 = vmul.f32 %v1125, %v1124
        %v1127 = vmul.f32 %v1126, %v1125
        %v1128 = vmul.f32 0.5, %v1127
        %v1129 = vsub.f32 1.5, %v1128
        %v1130 = vmul.f32 %v1125, %v1129
        %vm1131 = vweird.f32 %v1124
        %vm1132 = vweird.f32 %v1125
        %vm1133 = vmor %vm1131, %vm1132
        %v1134 = vsel %vm1133, %v1125, %v1130
        %v1135 = vmul.f32 %v1118, %v1134
        %1136 = vst.msk [vmem:[%s529] sm:$0xff] %vm602, %v1135
        %v1137 = vsub.f32 %v906, %v1054
        %v1138 = vadd.f32 %v1137, %v568
        %v1139 = vsel %vm1088, %v1138, 0.0
        %1140 = vadd.xlane.f32.xlu0 %v1139
        %v1141 = vpop.xlane.xlu0 %1140
        %v1142 = vmul.f32 %v1141, %v1066
        %v1143 = vsub.f32 %v1138, %v1142
        %v1144 = vmul.f32 %v1143, %v1143
        %v1145 = vsel %vm1088, %v1144, 0.0
        %1146 = vadd.xlane.f32.xlu0 %v1145
        %v1147 = vpop.xlane.xlu0 %1146
        %v1148 = vmul.f32 %v1147, %v1066
        %v1149 = vadd.f32 %v1148, 1e-05
        %v1150 = vrsqrt.pop %v1149
        %v1151 = vmul.f32 %v1150, %v1149
        %v1152 = vmul.f32 %v1151, %v1150
        %v1153 = vmul.f32 0.5, %v1152
        %v1154 = vsub.f32 1.5, %v1153
        %v1155 = vmul.f32 %v1150, %v1154
        %vm1156 = vweird.f32 %v1149
        %vm1157 = vweird.f32 %v1150
        %vm1158 = vmor %vm1156, %vm1157
        %v1159 = vsel %vm1158, %v1150, %v1155
        %v1160 = vmul.f32 %v1143, %v1159
        %1161 = vst.msk [vmem:[%s536] sm:$0xf] %vm1088, %v1160
        %s1162 = sand.u32 %s271, 1
        %s1163 = scalar_lea.sflag [#allocation4], %s1162
        %s1164 = sand.u32 %s271, 1
        %s1165 = smul.addr %s1164, 8
        %s1166 = scalar_lea.vmem [#allocation5], %s1165
        %s1167 = sand.u32 %s34, 1
        %s1168 = scalar_lea.sflag [#allocation7], %s1167
        %s1169 = sand.u32 %s297, 1
        %s1170 = smul.addr %s1169, 4
        %s1171 = scalar_lea.vmem [#allocation6], %s1170
        %s1172 = sand.u32 %s34, 1
        %s1173 = scalar_lea.sflag [#allocation7], %s1172
        %s1174 = sand.u32 %s323, 1
        %s1175 = smul.addr %s1174, 8
        %s1176 = scalar_lea.vmem [#allocation8], %s1175
        %s1177 = sand.u32 %s349, 1
        %s1178 = scalar_lea.sflag [#allocation10], %s1177
        %s1179 = sand.u32 %s349, 1
        %s1180 = smul.addr %s1179, 4
        %s1181 = scalar_lea.vmem [#allocation9], %s1180
        // Predicated region
        $region61: #{tpu_custom_call.1} parent=55 // pred_check
          %p1182 = pneg %p281
        $region62: #{tpu_custom_call.1} parent=55 // pred_check_branch
          %1184 = sbr.rel (%p1182) target = $region64
        $region63: #{tpu_custom_call.1} parent=55 // pred_region
          %1186 = vsyncadd %s1163, 0
          %s1187 = smul.addr %s34, 8
          %s1188 = scalar_lea.hbm %s9, %s1187
          %s1190 = sshll.u32 %s1166, 4
          %s1191 = int_to_ptr.vmem [resolvable:$true] %s1190
          %s1192 = sshll.u32 %s1188, 4
          %s1193 = int_to_ptr.hbm [resolvable:$true] %s1192
          %1195 = dma.vmem_to_hbm [thread:$0]  %s1191, 128, %s1193, %s1163
        $region64: #{tpu_custom_call.1} parent=55 // pred_fallthru
          _
        // Predicated region
        $region65: #{tpu_custom_call.1} parent=55 // pred_check
          %p1196 = pneg %p307
        $region66: #{tpu_custom_call.1} parent=55 // pred_check_branch
          %1198 = sbr.rel (%p1196) target = $region68
        $region67: #{tpu_custom_call.1} parent=55 // pred_region
          %1200 = vsyncadd %s1168, 0
          %s1201 = smul.addr %s34, 4
          %s1202 = scalar_lea.hbm %s10, %s1201
          %s1204 = sshll.u32 %s1171, 4
          %s1205 = int_to_ptr.vmem [resolvable:$true] %s1204
          %s1206 = sshll.u32 %s1202, 4
          %s1207 = int_to_ptr.hbm [resolvable:$true] %s1206
          %1209 = dma.vmem_to_hbm [thread:$0]  %s1205, 64, %s1207, %s1168
        $region68: #{tpu_custom_call.1} parent=55 // pred_fallthru
          _
        // Predicated region
        $region69: #{tpu_custom_call.1} parent=55 // pred_check
          %p1210 = pneg %p333
        $region70: #{tpu_custom_call.1} parent=55 // pred_check_branch
          %1212 = sbr.rel (%p1210) target = $region72
        $region71: #{tpu_custom_call.1} parent=55 // pred_region
          %1214 = vsyncadd %s1173, 0
          %s1215 = smul.addr %s34, 8
          %s1216 = scalar_lea.hbm %s11, %s1215
          %s1218 = sshll.u32 %s1176, 4
          %s1219 = int_to_ptr.vmem [resolvable:$true] %s1218
          %s1220 = sshll.u32 %s1216, 4
          %s1221 = int_to_ptr.hbm [resolvable:$true] %s1220
          %1223 = dma.vmem_to_hbm [thread:$0]  %s1219, 128, %s1221, %s1173
        $region72: #{tpu_custom_call.1} parent=55 // pred_fallthru
          _
        // Predicated region
        $region73: #{tpu_custom_call.1} parent=55 // pred_check
          %p1224 = pneg %p359
        $region74: #{tpu_custom_call.1} parent=55 // pred_check_branch
          %1226 = sbr.rel (%p1224) target = $region76
        $region75: #{tpu_custom_call.1} parent=55 // pred_region
          %1228 = vsyncadd %s1178, 0
          %s1229 = smul.addr %s34, 4
          %s1230 = scalar_lea.hbm %s12, %s1229
          %s1232 = sshll.u32 %s1181, 4
          %s1233 = int_to_ptr.vmem [resolvable:$true] %s1232
          %s1234 = sshll.u32 %s1230, 4
          %s1235 = int_to_ptr.hbm [resolvable:$true] %s1234
          %1237 = dma.vmem_to_hbm [thread:$0]  %s1233, 64, %s1235, %s1178
        $region76: #{tpu_custom_call.1} parent=55 // pred_fallthru
          _
      $region56: #{tpu_custom_call.1} parent=5 // pred_fallthru
        _
      %p1238 = scmp.le.s32.totalorder 2, %s29
      // Predicated region
      $region77: #{tpu_custom_call.1} parent=5 // pred_check
        %p1239 = pneg %p1238
      $region78: #{tpu_custom_call.1} parent=5 // pred_check_branch
        %1241 = sbr.rel (%p1239) target = $region80
      $region79: #{tpu_custom_call.1} parent=5 // pred_region
        %s1242 = ssub.s32 %s29, 2
        // Predicated region
        $region81: #{tpu_custom_call.1} parent=79 // pred_check
          %p1243 = pneg %p287
        $region82: #{tpu_custom_call.1} parent=79 // pred_check_branch
          %1245 = sbr.rel (%p1243) target = $region84
        $region83: #{tpu_custom_call.1} parent=79 // pred_region
          %s1246 = sand.u32 %s272, 1
          %s1247 = scalar_lea.sflag [#allocation4], %s1246
          %s1248 = sand.u32 %s272, 1
          %s1249 = smul.addr %s1248, 8
          %s1250 = scalar_lea.vmem [#allocation5], %s1249
          %1252 = dma.done %s1247, 128
        $region84: #{tpu_custom_call.1} parent=79 // pred_fallthru
          _
        // Predicated region
        $region85: #{tpu_custom_call.1} parent=79 // pred_check
          %p1253 = pneg %p313
        $region86: #{tpu_custom_call.1} parent=79 // pred_check_branch
          %1255 = sbr.rel (%p1253) target = $region88
        $region87: #{tpu_custom_call.1} parent=79 // pred_region
          %s1256 = sand.u32 %s35, 1
          %s1257 = scalar_lea.sflag [#allocation7], %s1256
          %s1258 = sand.u32 %s298, 1
          %s1259 = smul.addr %s1258, 4
          %s1260 = scalar_lea.vmem [#allocation6], %s1259
          %1262 = dma.done %s1257, 64
        $region88: #{tpu_custom_call.1} parent=79 // pred_fallthru
          _
        // Predicated region
        $region89: #{tpu_custom_call.1} parent=79 // pred_check
          %p1263 = pneg %p339
        $region90: #{tpu_custom_call.1} parent=79 // pred_check_branch
          %1265 = sbr.rel (%p1263) target = $region92
        $region91: #{tpu_custom_call.1} parent=79 // pred_region
          %s1266 = sand.u32 %s35, 1
          %s1267 = scalar_lea.sflag [#allocation7], %s1266
          %s1268 = sand.u32 %s324, 1
          %s1269 = smul.addr %s1268, 8
          %s1270 = scalar_lea.vmem [#allocation8], %s1269
          %1272 = dma.done %s1267, 128
        $region92: #{tpu_custom_call.1} parent=79 // pred_fallthru
          _
        // Predicated region
        $region93: #{tpu_custom_call.1} parent=79 // pred_check
          %p1273 = pneg %p365
        $region94: #{tpu_custom_call.1} parent=79 // pred_check_branch
          %1275 = sbr.rel (%p1273) target = $region96
        $region95: #{tpu_custom_call.1} parent=79 // pred_region
          %s1276 = sand.u32 %s350, 1
          %s1277 = scalar_lea.sflag [#allocation10], %s1276
          %s1278 = sand.u32 %s350, 1
          %s1279 = smul.addr %s1278, 4
          %s1280 = scalar_lea.vmem [#allocation9], %s1279
          %1282 = dma.done %s1277, 64
        $region96: #{tpu_custom_call.1} parent=79 // pred_fallthru
          _
      $region80: #{tpu_custom_call.1} parent=5 // pred_fallthru
        _
    $region6: #{tpu_custom_call.1} parent=1 // loop_footer
      %s33 = sadd.s32 1, %s29
    $region7: #{tpu_custom_call.1} parent=1 // loop_footer_branch
      %28 = sbr.rel target = $region3
    $region8: #{tpu_custom_call.1} parent=1 // loop_exit
      _
    %1283 = vsyncpa [#allocation3], 1
    %s1284 = scalar_lea.sflag [#allocation3], 1
    %1285 = vsyncpa %s1284, 1
    %1286 = vsyncpa [#allocation4], 1
    %s1287 = scalar_lea.sflag [#allocation4], 1
    %1288 = vsyncpa %s1287, 1
    %1289 = vsyncpa [#allocation7], 1
    %s1290 = scalar_lea.sflag [#allocation7], 1
    %1291 = vsyncpa %s1290, 1
    %1292 = vsyncpa [#allocation10], 1
    %s1293 = scalar_lea.sflag [#allocation10], 1
    %1294 = vsyncpa %s1293, 1

</llo_original>
